<compile_context>
chip_gen: v5e
topology: v5e:2x2
jax: 0.10.0
libtpu: 0.0.40
codegen_flags: <defaults>
</compile_context>

<pallas_src>
import math
import functools

import jax
import jax.numpy as jnp
import numpy as np
from jax.experimental import pallas as pl
from jax.experimental.pallas import tpu as pltpu

NEG_INF = -1e30   # numerically identical to -inf after f32 softmax
LN_EPS = 1e-5     # PyTorch LayerNorm default


# ---------------------------------------------------------------------------
# Fused Pallas kernel: one grid step = (batch block, encoder layer)
# ---------------------------------------------------------------------------
def _lsm_kernel(x_ref, pe_ref,
                wqkv_ref, bqkv_ref, wo_ref, bo_ref,
                ln1w_ref, ln1b_ref, w1_ref, b1_ref, w2_ref, b2_ref,
                ln2w_ref, ln2b_ref,
                dec_w_ref, dec_b_ref,
                o_ref,
                act_ref, ctx_ref,
                *, num_heads):
    l = pl.program_id(1)
    last_l = pl.num_programs(1) - 1
    Bb, D, T = x_ref.shape
    hd = D // num_heads
    N = Bb * T

    # ---- layer 0: fold the (B, D, T) -> (T, D) input permute + PE add in-kernel
    @pl.when(l == 0)
    def _init():
        pe = pe_ref[...]
        for b in range(Bb):                                   # Bb small by construction
            act_ref[b] = x_ref[b].T.astype(jnp.float32) + pe  # 2-D transpose per batch elem

    x = act_ref[...].reshape(N, D)                            # residual stream (f32)

    # causal additive mask built in-kernel (no (T,T) HBM array)
    row = jax.lax.broadcasted_iota(jnp.int32, (T, T), 0)
    col = jax.lax.broadcasted_iota(jnp.int32, (T, T), 1)
    mask = jnp.where(col <= row, 0.0, NEG_INF).astype(jnp.float32)

    # ---- fused QKV projection: one (N, D) @ (D, 3D) bf16 MXU pass ----
    qkv = jnp.dot(x.astype(jnp.bfloat16), wqkv_ref[...],
                  preferred_element_type=jnp.float32) + bqkv_ref[...]   # (N, 3D) f32
    # 1/sqrt(hd) is already folded into the Q columns of wqkv / bqkv.

    # ---- multi-head attention: batched (over Bb) matmuls per head, head contexts
    #      written into a VMEM scratch slab (no jnp.concatenate), one out-proj.
    # TODO(synk): collapse the head loop into a single head-batched dot_general once
    #             multi-batch-dim dot_general lowering is robust for hd < 128.
    for h in range(num_heads):
        q = qkv[:, h * hd:(h + 1) * hd].reshape(Bb, T, hd).astype(jnp.bfloat16)
        k = qkv[:, D + h * hd:D + (h + 1) * hd].reshape(Bb, T, hd).astype(jnp.bfloat16)
        v = qkv[:, 2 * D + h * hd:2 * D + (h + 1) * hd].reshape(Bb, T, hd).astype(jnp.bfloat16)
        s = jax.lax.dot_general(q, k, (((2,), (2,)), ((0,), (0,))),
                                preferred_element_type=jnp.float32)     # (Bb, T, T)
        s = s + mask[None]
        s = s - jnp.max(s, axis=-1, keepdims=True)
        p = jnp.exp(s)
        p = p * pl.reciprocal(jnp.sum(p, axis=-1, keepdims=True), approx=True)
        c = jax.lax.dot_general(p.astype(jnp.bfloat16), v,
                                (((2,), (1,)), ((0,), (0,))),
                                preferred_element_type=jnp.float32)     # (Bb, T, hd)
        ctx_ref[:, h * hd:(h + 1) * hd] = c.reshape(N, hd)
    attn = jnp.dot(ctx_ref[...].astype(jnp.bfloat16), wo_ref[...],
                   preferred_element_type=jnp.float32) + bo_ref[...]    # (N, D)

    # ---- residual + LayerNorm 1 (f32) ----
    x1 = x + attn
    mu = jnp.mean(x1, axis=-1, keepdims=True)
    var = jnp.mean((x1 - mu) ** 2, axis=-1, keepdims=True)
    x1 = (x1 - mu) * jax.lax.rsqrt(var + LN_EPS) * ln1w_ref[...] + ln1b_ref[...]

    # ---- feed-forward (ReLU) + residual + LayerNorm 2 ----
    hmid = jnp.maximum(
        jnp.dot(x1.astype(jnp.bfloat16), w1_ref[...],
                preferred_element_type=jnp.float32) + b1_ref[...], 0.0)
    ff = jnp.dot(hmid.astype(jnp.bfloat16), w2_ref[...],
                 preferred_element_type=jnp.float32) + b2_ref[...]
    x2 = x1 + ff
    mu2 = jnp.mean(x2, axis=-1, keepdims=True)
    var2 = jnp.mean((x2 - mu2) ** 2, axis=-1, keepdims=True)
    xo = (x2 - mu2) * jax.lax.rsqrt(var2 + LN_EPS) * ln2w_ref[...] + ln2b_ref[...]

    act_ref[...] = xo.reshape(Bb, T, D)        # carry residual stream to next layer step

    # ---- last layer: decoder Linear, stored already transposed to (O, T) ----
    @pl.when(l == last_l)
    def _decode():
        y = jnp.dot(xo.astype(jnp.bfloat16), dec_w_ref[...],
                    preferred_element_type=jnp.float32) + dec_b_ref[...]   # (N, O)
        y3 = y.reshape(Bb, T, -1)
        for b in range(Bb):
            o_ref[b] = y3[b].T                 # (O, T): the wrapper transpose is gone


# ---------------------------------------------------------------------------
# pallas_call wrapper
# ---------------------------------------------------------------------------
def _layer_spec(*dims):
    # one layer's weights per grid step, streamed (prefetched) along the layer axis
    zeros = (0,) * len(dims)
    return pl.BlockSpec((pl.Squeezed(),) + dims, lambda b, l: (l,) + zeros)


def _const_spec(*dims):
    # small constant-index operands (PE table, decoder) stay resident
    zeros = (0,) * len(dims)
    return pl.BlockSpec(dims, lambda b, l: zeros)


def _pick_batch_block(B, T):
    kind = jax.devices()[0].device_kind.lower()
    target_rows = 128 if ("v5 lite" in kind or "v5e" in kind) else 256   # v5e MXU is 128-row
    bb = max(1, min(B, target_rows // max(T, 1)))
    if B >= 2:
        bb = min(bb, B // 2)     # >= 2 batch grid steps so the parallel axis feeds 2 TCs (v7x)
    bb = max(bb, 1)
    while B % bb:
        bb -= 1
    return bb


def _vmem_limit_bytes(block_b, T, D, Hdim, O):
    f32, bf16 = 4, 2
    per_layer_w = ((3 * D * D + D * D + D * Hdim + Hdim * D) * bf16
                   + (3 * D + D + Hdim + D + 4 * D) * f32)
    resident = (block_b * D * T * f32 + T * D * f32
                + D * O * bf16 + O * f32 + block_b * O * T * f32)
    scratch = 2 * block_b * T * D * f32
    live = block_b * T * (3 * D + 4 * D + Hdim) * f32 + 2 * block_b * T * T * f32
    est = 2 * per_layer_w + 2 * resident + scratch + live + (8 << 20)
    return int(min(max(est, 32 << 20), 64 << 20))   # <= 64 MiB: valid on v7x too


def _fused_forward(src, pe, p, num_heads, block_b):
    B, D, T = src.shape
    L = p["wqkv"].shape[0]
    Hdim = p["w1"].shape[2]
    O = p["dec_w"].shape[1]
    in_specs = [
        pl.BlockSpec((block_b, D, T), lambda b, l: (b, 0, 0)),  # src (permute folded in-kernel)
        _const_spec(T, D),                                      # positional encoding
        _layer_spec(D, 3 * D), _layer_spec(1, 3 * D),           # fused QKV (streamed per layer)
        _layer_spec(D, D), _layer_spec(1, D),                   # attn out projection
        _layer_spec(1, D), _layer_spec(1, D),                   # ln1
        _layer_spec(D, Hdim), _layer_spec(1, Hdim),             # linear1
        _layer_spec(Hdim, D), _layer_spec(1, D),                # linear2
        _layer_spec(1, D), _layer_spec(1, D),                   # ln2
        _const_spec(D, O), _const_spec(1, O),                   # decoder (tiny, resident)
    ]
    return pl.pallas_call(
        functools.partial(_lsm_kernel, num_heads=num_heads),
        out_shape=jax.ShapeDtypeStruct((B, O, T), jnp.float32),
        grid=(B // block_b, L),
        in_specs=in_specs,
        out_specs=pl.BlockSpec((block_b, O, T), lambda b, l: (b, 0, 0)),
        scratch_shapes=[pltpu.VMEM((block_b, T, D), jnp.float32),    # residual-stream carry
                        pltpu.VMEM((block_b * T, D), jnp.float32)],  # head-context slab
        compiler_params=pltpu.CompilerParams(
            dimension_semantics=("parallel", "arbitrary"),
            vmem_limit_bytes=_vmem_limit_bytes(block_b, T, D, Hdim, O)),
    )(src, pe,
      p["wqkv"], p["bqkv"], p["wo"], p["bo"],
      p["ln1w"], p["ln1b"], p["w1"], p["b1"], p["w2"], p["b2"],
      p["ln2w"], p["ln2b"], p["dec_w"], p["dec_b"])


@functools.partial(jax.jit, static_argnames=("num_heads",))
def lsm_transformer_forward(src, pe, params, num_heads):
    # src: (B, inp_dim, T) -> out: (B, out_dim, T); both permutes happen in-kernel.
    B, D, T = src.shape
    block_b = _pick_batch_block(B, T)
    return _fused_forward(src.astype(jnp.float32), pe, params, num_heads, block_b)


# ---------------------------------------------------------------------------
# Model glue (plain JAX): positional-encoding table + parameter setup
# ---------------------------------------------------------------------------
def positional_encoding(seq_len, d_model, max_len=25000):
    position = jnp.arange(max_len, dtype=jnp.float32)[:, None]
    div_term = jnp.exp(jnp.arange(0, d_model, 2, dtype=jnp.float32)
                       * (-math.log(10000.0) / d_model))
    pe = jnp.zeros((max_len, d_model), jnp.float32)
    pe = pe.at[:, 0::2].set(jnp.sin(position * div_term))
    pe = pe.at[:, 1::2].set(jnp.cos(position * div_term))
    return pe[:seq_len]


def init_params(key, inp_dim, out_dim, num_heads, hidden_dim, num_layers):
    d, hdim = inp_dim, hidden_dim
    hd = d // num_heads
    scale = 1.0 / math.sqrt(hd)
    wqkv, bqkv, wo, bo = [], [], [], []
    ln1w, ln1b, w1, b1, w2, b2, ln2w, ln2b = ([] for _ in range(8))
    for _ in range(num_layers):
        key, k0, k1, k2, k3 = jax.random.split(key, 5)
        in_proj_w = (jax.random.uniform(k0, (3 * d, d), jnp.float32) - 0.5) * (2.0 / math.sqrt(d))
        in_proj_b = jnp.zeros((3 * d,), jnp.float32)
        out_proj_w = (jax.random.uniform(k1, (d, d), jnp.float32) - 0.5) * (2.0 / math.sqrt(d))
        lin1_w = (jax.random.uniform(k2, (hdim, d), jnp.float32) - 0.5) * (2.0 / math.sqrt(d))
        lin2_w = (jax.random.uniform(k3, (d, hdim), jnp.float32) - 0.5) * (2.0 / math.sqrt(hdim))

        w_qkv = in_proj_w.T                       # (d, 3d) so that x @ w_qkv == x @ W.T
        w_qkv = w_qkv.at[:, :d].multiply(scale)   # fold 1/sqrt(hd) into the Q block
        b_qkv = in_proj_b.at[:d].multiply(scale)

        wqkv.append(w_qkv);              bqkv.append(b_qkv.reshape(1, 3 * d))
        wo.append(out_proj_w.T);         bo.append(jnp.zeros((1, d), jnp.float32))
        ln1w.append(jnp.ones((1, d)));   ln1b.append(jnp.zeros((1, d)))
        w1.append(lin1_w.T);             b1.append(jnp.zeros((1, hdim), jnp.float32))
        w2.append(lin2_w.T);             b2.append(jnp.zeros((1, d), jnp.float32))
        ln2w.append(jnp.ones((1, d)));   ln2b.append(jnp.zeros((1, d)))
    key, kd = jax.random.split(key)
    dec_w = jax.random.uniform(kd, (out_dim, d), jnp.float32, -0.1, 0.1)  # init_weights()

    stack = lambda xs: jnp.stack(xs, axis=0)
    return dict(
        # matmul weights stored bf16 (f32 accumulation inside the kernel)
        wqkv=stack(wqkv).astype(jnp.bfloat16), bqkv=stack(bqkv),
        wo=stack(wo).astype(jnp.bfloat16),     bo=stack(bo),
        ln1w=stack(ln1w), ln1b=stack(ln1b),
        w1=stack(w1).astype(jnp.bfloat16),     b1=stack(b1),
        w2=stack(w2).astype(jnp.bfloat16),     b2=stack(b2),
        ln2w=stack(ln2w), ln2b=stack(ln2b),
        dec_w=dec_w.T.astype(jnp.bfloat16),
        dec_b=jnp.zeros((1, out_dim), jnp.float32),
    )


# ---------------------------------------------------------------------------
# pure-JAX reference (same bf16-matmul / f32-accumulate policy as the kernel)
# ---------------------------------------------------------------------------
def _layer_norm(x, w, b):
    mu = jnp.mean(x, axis=-1, keepdims=True)
    var = jnp.mean((x - mu) ** 2, axis=-1, keepdims=True)
    return (x - mu) * jax.lax.rsqrt(var + LN_EPS) * w + b


def reference_forward(src, pe, params, num_heads):
    B, D, T = src.shape
    hd = D // num_heads
    x = jnp.transpose(src, (0, 2, 1)).astype(jnp.float32) + pe[None]
    mask = jnp.where(jnp.arange(T)[None, :] <= jnp.arange(T)[:, None], 0.0, NEG_INF)
    L = params["wqkv"].shape[0]

    def mm(a, w):  # bf16 matmul inputs, f32 accumulation (matches kernel policy)
        return jnp.einsum('...ij,jk->...ik', a.astype(jnp.bfloat16), w,
                          preferred_element_type=jnp.float32)

    for l in range(L):
        qkv = mm(x, params["wqkv"][l]) + params["bqkv"][l]            # (B, T, 3D)
        q = qkv[..., :D].reshape(B, T, num_heads, hd).transpose(0, 2, 1, 3)
        k = qkv[..., D:2 * D].reshape(B, T, num_heads, hd).transpose(0, 2, 1, 3)
        v = qkv[..., 2 * D:].reshape(B, T, num_heads, hd).transpose(0, 2, 1, 3)
        s = jnp.einsum('bhqe,bhke->bhqk', q.astype(jnp.bfloat16), k.astype(jnp.bfloat16),
                       preferred_element_type=jnp.float32) + mask
        a = jax.nn.softmax(s, axis=-1)
        c = jnp.einsum('bhqk,bhke->bhqe', a.astype(jnp.bfloat16), v.astype(jnp.bfloat16),
                       preferred_element_type=jnp.float32)
        c = c.transpose(0, 2, 1, 3).reshape(B, T, D)
        attn = mm(c, params["wo"][l]) + params["bo"][l]
        x = _layer_norm(x + attn, params["ln1w"][l], params["ln1b"][l])
        ff = mm(jnp.maximum(mm(x, params["w1"][l]) + params["b1"][l], 0.0),
                params["w2"][l]) + params["b2"][l]
        x = _layer_norm(x + ff, params["ln2w"][l], params["ln2b"][l])
    y = mm(x, params["dec_w"]) + params["dec_b"]
    return jnp.transpose(y, (0, 2, 1))


# ---------------------------------------------------------------------------
if __name__ == "__main__":
    B, inp_dim, T = 2, 32, 8
    num_heads, hidden_dim, num_layers, out_dim = 4, 64, 2, 16

    key = jax.random.PRNGKey(0)
    kp, kx = jax.random.split(key)
    params = init_params(kp, inp_dim, out_dim, num_heads, hidden_dim, num_layers)
    src = jax.random.normal(kx, (B, inp_dim, T), jnp.float32)
    pe = positional_encoding(T, inp_dim)   # built once, outside the forward path

    out = lsm_transformer_forward(src, pe, params, num_heads)
    out = jax.block_until_ready(out)

    ref = reference_forward(src, pe, params, num_heads)
    assert out.shape == (B, out_dim, T), out.shape
    np.testing.assert_allclose(np.asarray(out), np.asarray(ref), rtol=1e-2, atol=1e-2)

    print("KERNEL_OK")
</pallas_src>

<mosaic_0001>
module attributes {stable_mosaic.version = 11 : i64} {
  func.func @_lsm_kernel(%arg0: i32, %arg1: i32, %arg2: memref<1x32x8xf32, #tpu.memory_space<vmem>>, %arg3: memref<8x32xf32, #tpu.memory_space<vmem>>, %arg4: memref<1x32x96xbf16, #tpu.memory_space<vmem>>, %arg5: memref<1x1x96xf32, #tpu.memory_space<vmem>>, %arg6: memref<1x32x32xbf16, #tpu.memory_space<vmem>>, %arg7: memref<1x1x32xf32, #tpu.memory_space<vmem>>, %arg8: memref<1x1x32xf32, #tpu.memory_space<vmem>>, %arg9: memref<1x1x32xf32, #tpu.memory_space<vmem>>, %arg10: memref<1x32x64xbf16, #tpu.memory_space<vmem>>, %arg11: memref<1x1x64xf32, #tpu.memory_space<vmem>>, %arg12: memref<1x64x32xbf16, #tpu.memory_space<vmem>>, %arg13: memref<1x1x32xf32, #tpu.memory_space<vmem>>, %arg14: memref<1x1x32xf32, #tpu.memory_space<vmem>>, %arg15: memref<1x1x32xf32, #tpu.memory_space<vmem>>, %arg16: memref<32x16xbf16, #tpu.memory_space<vmem>>, %arg17: memref<1x16xf32, #tpu.memory_space<vmem>>, %arg18: memref<1x16x8xf32, #tpu.memory_space<vmem>>, %arg19: memref<1x8x32xf32, #tpu.memory_space<vmem>>, %arg20: memref<8x32xf32, #tpu.memory_space<vmem>>) attributes {dimension_semantics = [#tpu.dimension_semantics<parallel>, #tpu.dimension_semantics<arbitrary>], iteration_bounds = array<i64: 2, 2>, scalar_prefetch = 0 : i64, scratch_operands = 2 : i64, tpu.core_type = #tpu.core_type<tc>, window_params = [{transform_indices = @transform_0, window_bounds = array<i64: 1, 32, 8>}, {pipeline_mode = #tpu.pipeline_mode<synchronous>, transform_indices = @transform_1, window_bounds = array<i64: 8, 32>}, {transform_indices = @transform_2, window_bounds = array<i64: 1, 32, 96>}, {transform_indices = @transform_3, window_bounds = array<i64: 1, 1, 96>}, {transform_indices = @transform_4, window_bounds = array<i64: 1, 32, 32>}, {transform_indices = @transform_5, window_bounds = array<i64: 1, 1, 32>}, {transform_indices = @transform_6, window_bounds = array<i64: 1, 1, 32>}, {transform_indices = @transform_7, window_bounds = array<i64: 1, 1, 32>}, {transform_indices = @transform_8, window_bounds = array<i64: 1, 32, 64>}, {transform_indices = @transform_9, window_bounds = array<i64: 1, 1, 64>}, {transform_indices = @transform_10, window_bounds = array<i64: 1, 64, 32>}, {transform_indices = @transform_11, window_bounds = array<i64: 1, 1, 32>}, {transform_indices = @transform_12, window_bounds = array<i64: 1, 1, 32>}, {transform_indices = @transform_13, window_bounds = array<i64: 1, 1, 32>}, {pipeline_mode = #tpu.pipeline_mode<synchronous>, transform_indices = @transform_14, window_bounds = array<i64: 32, 16>}, {pipeline_mode = #tpu.pipeline_mode<synchronous>, transform_indices = @transform_15, window_bounds = array<i64: 1, 16>}, {transform_indices = @transform_16, window_bounds = array<i64: 1, 16, 8>}]} {
    %c0_i32 = arith.constant 0 : i32
    %0 = arith.cmpi eq, %arg1, %c0_i32 : i32
    %1 = arith.extui %0 : i1 to i32
    %c0_i32_0 = arith.constant 0 : i32
    %2 = arith.cmpi ne, %1, %c0_i32_0 : i32
    scf.if %2 {
      %c0_82 = arith.constant 0 : index
      %c0_83 = arith.constant 0 : index
      %209 = vector.load %arg3[%c0_82, %c0_83] : memref<8x32xf32, #tpu.memory_space<vmem>>, vector<8x32xf32>
      %c0_84 = arith.constant 0 : index
      %c0_85 = arith.constant 0 : index
      %c0_86 = arith.constant 0 : index
      %210 = vector.load %arg2[%c0_84, %c0_85, %c0_86] : memref<1x32x8xf32, #tpu.memory_space<vmem>>, vector<1x32x8xf32>
      %211 = vector.shape_cast %210 : vector<1x32x8xf32> to vector<32x8xf32>
      %212 = tpu.transpose %211, [1, 0] : vector<32x8xf32> -> vector<8x32xf32>
      %213 = arith.addf %212, %209 : vector<8x32xf32>
      %c0_87 = arith.constant 0 : index
      %c0_88 = arith.constant 0 : index
      %c0_89 = arith.constant 0 : index
      %214 = vector.load %arg19[%c0_87, %c0_88, %c0_89] : memref<1x8x32xf32, #tpu.memory_space<vmem>>, vector<1x8x32xf32>
      %215 = vector.shape_cast %214 : vector<1x8x32xf32> to vector<8x32xf32>
      %216 = vector.shape_cast %213 : vector<8x32xf32> to vector<1x8x32xf32>
      tpu.vector_store %arg19[%c0_87, %c0_88, %c0_89], %216 {strides = array<i32>} : memref<1x8x32xf32, #tpu.memory_space<vmem>>, vector<1x8x32xf32>,
    } else {
    }
    %c0 = arith.constant 0 : index
    %c0_1 = arith.constant 0 : index
    %c0_2 = arith.constant 0 : index
    %3 = vector.load %arg19[%c0, %c0_1, %c0_2] : memref<1x8x32xf32, #tpu.memory_space<vmem>>, vector<1x8x32xf32>
    %4 = vector.shape_cast %3 : vector<1x8x32xf32> to vector<8x32xf32>
    %5 = tpu.iota {dimensions = array<i32: 0>} : vector<8x8xi32>
    %6 = tpu.iota {dimensions = array<i32: 1>} : vector<8x8xi32>
    %7 = arith.cmpi sle, %6, %5 : vector<8x8xi32>
    %cst = arith.constant 0.000000e+00 : f32
    %cst_3 = arith.constant -1.000000e+30 : f32
    %8 = vector.broadcast %cst : f32 to vector<8x8xf32>
    %9 = vector.broadcast %cst_3 : f32 to vector<8x8xf32>
    %10 = arith.select %7, %8, %9 : vector<8x8xi1>, vector<8x8xf32>
    %11 = arith.truncf %4 : vector<8x32xf32> to vector<8x32xbf16>
    %c0_4 = arith.constant 0 : index
    %c0_5 = arith.constant 0 : index
    %c0_6 = arith.constant 0 : index
    %12 = vector.load %arg4[%c0_4, %c0_5, %c0_6] : memref<1x32x96xbf16, #tpu.memory_space<vmem>>, vector<1x32x96xbf16>
    %13 = vector.shape_cast %12 : vector<1x32x96xbf16> to vector<32x96xbf16>
    %cst_7 = arith.constant dense<0.000000e+00> : vector<8x96xf32>
    %14 = tpu.matmul %11, %13, %cst_7 {dimension_numbers = #tpu.dot_dimension_numbers<[1], [0], [0], [1], [0, 0, 1, 1], [], []>} : vector<8x32xbf16>, vector<32x96xbf16>, vector<8x96xf32> -> vector<8x96xf32>
    %c0_8 = arith.constant 0 : index
    %c0_9 = arith.constant 0 : index
    %c0_10 = arith.constant 0 : index
    %15 = vector.load %arg5[%c0_8, %c0_9, %c0_10] : memref<1x1x96xf32, #tpu.memory_space<vmem>>, vector<1x1x96xf32>
    %16 = vector.shape_cast %15 : vector<1x1x96xf32> to vector<1x96xf32>
    %17 = vector.broadcast %16 : vector<1x96xf32> to vector<8x96xf32>
    %18 = arith.addf %14, %17 : vector<8x96xf32>
    %19 = vector.extract_strided_slice %18 {offsets = [0, 0], sizes = [8, 8], strides = [1, 1]} : vector<8x96xf32> to vector<8x8xf32>
    %20 = vector.shape_cast %19 : vector<8x8xf32> to vector<1x8x8xf32>
    %21 = arith.truncf %20 : vector<1x8x8xf32> to vector<1x8x8xbf16>
    %22 = vector.extract_strided_slice %18 {offsets = [0, 32], sizes = [8, 8], strides = [1, 1]} : vector<8x96xf32> to vector<8x8xf32>
    %23 = vector.shape_cast %22 : vector<8x8xf32> to vector<1x8x8xf32>
    %24 = arith.truncf %23 : vector<1x8x8xf32> to vector<1x8x8xbf16>
    %25 = vector.extract_strided_slice %18 {offsets = [0, 64], sizes = [8, 8], strides = [1, 1]} : vector<8x96xf32> to vector<8x8xf32>
    %26 = vector.shape_cast %25 : vector<8x8xf32> to vector<1x8x8xf32>
    %27 = arith.truncf %26 : vector<1x8x8xf32> to vector<1x8x8xbf16>
    %cst_11 = arith.constant dense<0.000000e+00> : vector<1x8x8xf32>
    %28 = tpu.matmul %21, %24, %cst_11 {dimension_numbers = #tpu.dot_dimension_numbers<[2], [2], [1], [1], [0, 0, 0, 1, 1, 1], [0], [0]>} : vector<1x8x8xbf16>, vector<1x8x8xbf16>, vector<1x8x8xf32> -> vector<1x8x8xf32>
    %29 = vector.shape_cast %10 : vector<8x8xf32> to vector<1x8x8xf32>
    %30 = arith.addf %28, %29 : vector<1x8x8xf32>
    %cst_12 = arith.constant dense<0xFF800000> : vector<1x8xf32>
    %31 = vector.multi_reduction <maximumf>, %30, %cst_12 [2] : vector<1x8x8xf32> to vector<1x8xf32>
    %32 = vector.shape_cast %31 : vector<1x8xf32> to vector<1x8x1xf32>
    %33 = vector.broadcast %32 : vector<1x8x1xf32> to vector<1x8x8xf32>
    %34 = arith.subf %30, %33 : vector<1x8x8xf32>
    %35 = math.exp %34 : vector<1x8x8xf32>
    %cst_13 = arith.constant dense<0.000000e+00> : vector<1x8xf32>
    %36 = vector.multi_reduction <add>, %35, %cst_13 [2] : vector<1x8x8xf32> to vector<1x8xf32>
    %37 = vector.shape_cast %36 : vector<1x8xf32> to vector<1x8x1xf32>
    %38 = tpu.reciprocal %37 {approx = true} : vector<1x8x1xf32> -> vector<1x8x1xf32>
    %39 = vector.broadcast %38 : vector<1x8x1xf32> to vector<1x8x8xf32>
    %40 = arith.mulf %35, %39 : vector<1x8x8xf32>
    %41 = arith.truncf %40 : vector<1x8x8xf32> to vector<1x8x8xbf16>
    %cst_14 = arith.constant dense<0.000000e+00> : vector<1x8x8xf32>
    %42 = tpu.matmul %41, %27, %cst_14 {dimension_numbers = #tpu.dot_dimension_numbers<[2], [1], [1], [2], [0, 0, 0, 1, 1, 2], [0], [0]>} : vector<1x8x8xbf16>, vector<1x8x8xbf16>, vector<1x8x8xf32> -> vector<1x8x8xf32>
    %43 = vector.shape_cast %42 : vector<1x8x8xf32> to vector<8x8xf32>
    %c0_15 = arith.constant 0 : index
    %c0_16 = arith.constant 0 : index
    %44 = vector.load %arg20[%c0_15, %c0_16] : memref<8x32xf32, #tpu.memory_space<vmem>>, vector<8x8xf32>
    tpu.vector_store %arg20[%c0_15, %c0_16], %43 {strides = array<i32>} : memref<8x32xf32, #tpu.memory_space<vmem>>, vector<8x8xf32>,
    %45 = vector.extract_strided_slice %18 {offsets = [0, 8], sizes = [8, 8], strides = [1, 1]} : vector<8x96xf32> to vector<8x8xf32>
    %46 = vector.shape_cast %45 : vector<8x8xf32> to vector<1x8x8xf32>
    %47 = arith.truncf %46 : vector<1x8x8xf32> to vector<1x8x8xbf16>
    %48 = vector.extract_strided_slice %18 {offsets = [0, 40], sizes = [8, 8], strides = [1, 1]} : vector<8x96xf32> to vector<8x8xf32>
    %49 = vector.shape_cast %48 : vector<8x8xf32> to vector<1x8x8xf32>
    %50 = arith.truncf %49 : vector<1x8x8xf32> to vector<1x8x8xbf16>
    %51 = vector.extract_strided_slice %18 {offsets = [0, 72], sizes = [8, 8], strides = [1, 1]} : vector<8x96xf32> to vector<8x8xf32>
    %52 = vector.shape_cast %51 : vector<8x8xf32> to vector<1x8x8xf32>
    %53 = arith.truncf %52 : vector<1x8x8xf32> to vector<1x8x8xbf16>
    %cst_17 = arith.constant dense<0.000000e+00> : vector<1x8x8xf32>
    %54 = tpu.matmul %47, %50, %cst_17 {dimension_numbers = #tpu.dot_dimension_numbers<[2], [2], [1], [1], [0, 0, 0, 1, 1, 1], [0], [0]>} : vector<1x8x8xbf16>, vector<1x8x8xbf16>, vector<1x8x8xf32> -> vector<1x8x8xf32>
    %55 = vector.shape_cast %10 : vector<8x8xf32> to vector<1x8x8xf32>
    %56 = arith.addf %54, %55 : vector<1x8x8xf32>
    %cst_18 = arith.constant dense<0xFF800000> : vector<1x8xf32>
    %57 = vector.multi_reduction <maximumf>, %56, %cst_18 [2] : vector<1x8x8xf32> to vector<1x8xf32>
    %58 = vector.shape_cast %57 : vector<1x8xf32> to vector<1x8x1xf32>
    %59 = vector.broadcast %58 : vector<1x8x1xf32> to vector<1x8x8xf32>
    %60 = arith.subf %56, %59 : vector<1x8x8xf32>
    %61 = math.exp %60 : vector<1x8x8xf32>
    %cst_19 = arith.constant dense<0.000000e+00> : vector<1x8xf32>
    %62 = vector.multi_reduction <add>, %61, %cst_19 [2] : vector<1x8x8xf32> to vector<1x8xf32>
    %63 = vector.shape_cast %62 : vector<1x8xf32> to vector<1x8x1xf32>
    %64 = tpu.reciprocal %63 {approx = true} : vector<1x8x1xf32> -> vector<1x8x1xf32>
    %65 = vector.broadcast %64 : vector<1x8x1xf32> to vector<1x8x8xf32>
    %66 = arith.mulf %61, %65 : vector<1x8x8xf32>
    %67 = arith.truncf %66 : vector<1x8x8xf32> to vector<1x8x8xbf16>
    %cst_20 = arith.constant dense<0.000000e+00> : vector<1x8x8xf32>
    %68 = tpu.matmul %67, %53, %cst_20 {dimension_numbers = #tpu.dot_dimension_numbers<[2], [1], [1], [2], [0, 0, 0, 1, 1, 2], [0], [0]>} : vector<1x8x8xbf16>, vector<1x8x8xbf16>, vector<1x8x8xf32> -> vector<1x8x8xf32>
    %69 = vector.shape_cast %68 : vector<1x8x8xf32> to vector<8x8xf32>
    %c0_21 = arith.constant 0 : index
    %c8 = arith.constant 8 : index
    %70 = vector.load %arg20[%c0_21, %c8] : memref<8x32xf32, #tpu.memory_space<vmem>>, vector<8x8xf32>
    tpu.vector_store %arg20[%c0_21, %c8], %69 {strides = array<i32>} : memref<8x32xf32, #tpu.memory_space<vmem>>, vector<8x8xf32>,
    %71 = vector.extract_strided_slice %18 {offsets = [0, 16], sizes = [8, 8], strides = [1, 1]} : vector<8x96xf32> to vector<8x8xf32>
    %72 = vector.shape_cast %71 : vector<8x8xf32> to vector<1x8x8xf32>
    %73 = arith.truncf %72 : vector<1x8x8xf32> to vector<1x8x8xbf16>
    %74 = vector.extract_strided_slice %18 {offsets = [0, 48], sizes = [8, 8], strides = [1, 1]} : vector<8x96xf32> to vector<8x8xf32>
    %75 = vector.shape_cast %74 : vector<8x8xf32> to vector<1x8x8xf32>
    %76 = arith.truncf %75 : vector<1x8x8xf32> to vector<1x8x8xbf16>
    %77 = vector.extract_strided_slice %18 {offsets = [0, 80], sizes = [8, 8], strides = [1, 1]} : vector<8x96xf32> to vector<8x8xf32>
    %78 = vector.shape_cast %77 : vector<8x8xf32> to vector<1x8x8xf32>
    %79 = arith.truncf %78 : vector<1x8x8xf32> to vector<1x8x8xbf16>
    %cst_22 = arith.constant dense<0.000000e+00> : vector<1x8x8xf32>
    %80 = tpu.matmul %73, %76, %cst_22 {dimension_numbers = #tpu.dot_dimension_numbers<[2], [2], [1], [1], [0, 0, 0, 1, 1, 1], [0], [0]>} : vector<1x8x8xbf16>, vector<1x8x8xbf16>, vector<1x8x8xf32> -> vector<1x8x8xf32>
    %81 = vector.shape_cast %10 : vector<8x8xf32> to vector<1x8x8xf32>
    %82 = arith.addf %80, %81 : vector<1x8x8xf32>
    %cst_23 = arith.constant dense<0xFF800000> : vector<1x8xf32>
    %83 = vector.multi_reduction <maximumf>, %82, %cst_23 [2] : vector<1x8x8xf32> to vector<1x8xf32>
    %84 = vector.shape_cast %83 : vector<1x8xf32> to vector<1x8x1xf32>
    %85 = vector.broadcast %84 : vector<1x8x1xf32> to vector<1x8x8xf32>
    %86 = arith.subf %82, %85 : vector<1x8x8xf32>
    %87 = math.exp %86 : vector<1x8x8xf32>
    %cst_24 = arith.constant dense<0.000000e+00> : vector<1x8xf32>
    %88 = vector.multi_reduction <add>, %87, %cst_24 [2] : vector<1x8x8xf32> to vector<1x8xf32>
    %89 = vector.shape_cast %88 : vector<1x8xf32> to vector<1x8x1xf32>
    %90 = tpu.reciprocal %89 {approx = true} : vector<1x8x1xf32> -> vector<1x8x1xf32>
    %91 = vector.broadcast %90 : vector<1x8x1xf32> to vector<1x8x8xf32>
    %92 = arith.mulf %87, %91 : vector<1x8x8xf32>
    %93 = arith.truncf %92 : vector<1x8x8xf32> to vector<1x8x8xbf16>
    %cst_25 = arith.constant dense<0.000000e+00> : vector<1x8x8xf32>
    %94 = tpu.matmul %93, %79, %cst_25 {dimension_numbers = #tpu.dot_dimension_numbers<[2], [1], [1], [2], [0, 0, 0, 1, 1, 2], [0], [0]>} : vector<1x8x8xbf16>, vector<1x8x8xbf16>, vector<1x8x8xf32> -> vector<1x8x8xf32>
    %95 = vector.shape_cast %94 : vector<1x8x8xf32> to vector<8x8xf32>
    %c0_26 = arith.constant 0 : index
    %c16 = arith.constant 16 : index
    %96 = vector.load %arg20[%c0_26, %c16] : memref<8x32xf32, #tpu.memory_space<vmem>>, vector<8x8xf32>
    tpu.vector_store %arg20[%c0_26, %c16], %95 {strides = array<i32>} : memref<8x32xf32, #tpu.memory_space<vmem>>, vector<8x8xf32>,
    %97 = vector.extract_strided_slice %18 {offsets = [0, 24], sizes = [8, 8], strides = [1, 1]} : vector<8x96xf32> to vector<8x8xf32>
    %98 = vector.shape_cast %97 : vector<8x8xf32> to vector<1x8x8xf32>
    %99 = arith.truncf %98 : vector<1x8x8xf32> to vector<1x8x8xbf16>
    %100 = vector.extract_strided_slice %18 {offsets = [0, 56], sizes = [8, 8], strides = [1, 1]} : vector<8x96xf32> to vector<8x8xf32>
    %101 = vector.shape_cast %100 : vector<8x8xf32> to vector<1x8x8xf32>
    %102 = arith.truncf %101 : vector<1x8x8xf32> to vector<1x8x8xbf16>
    %103 = vector.extract_strided_slice %18 {offsets = [0, 88], sizes = [8, 8], strides = [1, 1]} : vector<8x96xf32> to vector<8x8xf32>
    %104 = vector.shape_cast %103 : vector<8x8xf32> to vector<1x8x8xf32>
    %105 = arith.truncf %104 : vector<1x8x8xf32> to vector<1x8x8xbf16>
    %cst_27 = arith.constant dense<0.000000e+00> : vector<1x8x8xf32>
    %106 = tpu.matmul %99, %102, %cst_27 {dimension_numbers = #tpu.dot_dimension_numbers<[2], [2], [1], [1], [0, 0, 0, 1, 1, 1], [0], [0]>} : vector<1x8x8xbf16>, vector<1x8x8xbf16>, vector<1x8x8xf32> -> vector<1x8x8xf32>
    %107 = vector.shape_cast %10 : vector<8x8xf32> to vector<1x8x8xf32>
    %108 = arith.addf %106, %107 : vector<1x8x8xf32>
    %cst_28 = arith.constant dense<0xFF800000> : vector<1x8xf32>
    %109 = vector.multi_reduction <maximumf>, %108, %cst_28 [2] : vector<1x8x8xf32> to vector<1x8xf32>
    %110 = vector.shape_cast %109 : vector<1x8xf32> to vector<1x8x1xf32>
    %111 = vector.broadcast %110 : vector<1x8x1xf32> to vector<1x8x8xf32>
    %112 = arith.subf %108, %111 : vector<1x8x8xf32>
    %113 = math.exp %112 : vector<1x8x8xf32>
    %cst_29 = arith.constant dense<0.000000e+00> : vector<1x8xf32>
    %114 = vector.multi_reduction <add>, %113, %cst_29 [2] : vector<1x8x8xf32> to vector<1x8xf32>
    %115 = vector.shape_cast %114 : vector<1x8xf32> to vector<1x8x1xf32>
    %116 = tpu.reciprocal %115 {approx = true} : vector<1x8x1xf32> -> vector<1x8x1xf32>
    %117 = vector.broadcast %116 : vector<1x8x1xf32> to vector<1x8x8xf32>
    %118 = arith.mulf %113, %117 : vector<1x8x8xf32>
    %119 = arith.truncf %118 : vector<1x8x8xf32> to vector<1x8x8xbf16>
    %cst_30 = arith.constant dense<0.000000e+00> : vector<1x8x8xf32>
    %120 = tpu.matmul %119, %105, %cst_30 {dimension_numbers = #tpu.dot_dimension_numbers<[2], [1], [1], [2], [0, 0, 0, 1, 1, 2], [0], [0]>} : vector<1x8x8xbf16>, vector<1x8x8xbf16>, vector<1x8x8xf32> -> vector<1x8x8xf32>
    %121 = vector.shape_cast %120 : vector<1x8x8xf32> to vector<8x8xf32>
    %c0_31 = arith.constant 0 : index
    %c24 = arith.constant 24 : index
    %122 = vector.load %arg20[%c0_31, %c24] : memref<8x32xf32, #tpu.memory_space<vmem>>, vector<8x8xf32>
    tpu.vector_store %arg20[%c0_31, %c24], %121 {strides = array<i32>} : memref<8x32xf32, #tpu.memory_space<vmem>>, vector<8x8xf32>,
    %c0_32 = arith.constant 0 : index
    %c0_33 = arith.constant 0 : index
    %123 = vector.load %arg20[%c0_32, %c0_33] : memref<8x32xf32, #tpu.memory_space<vmem>>, vector<8x32xf32>
    %124 = arith.truncf %123 : vector<8x32xf32> to vector<8x32xbf16>
    %c0_34 = arith.constant 0 : index
    %c0_35 = arith.constant 0 : index
    %c0_36 = arith.constant 0 : index
    %125 = vector.load %arg6[%c0_34, %c0_35, %c0_36] : memref<1x32x32xbf16, #tpu.memory_space<vmem>>, vector<1x32x32xbf16>
    %126 = vector.shape_cast %125 : vector<1x32x32xbf16> to vector<32x32xbf16>
    %cst_37 = arith.constant dense<0.000000e+00> : vector<8x32xf32>
    %127 = tpu.matmul %124, %126, %cst_37 {dimension_numbers = #tpu.dot_dimension_numbers<[1], [0], [0], [1], [0, 0, 1, 1], [], []>} : vector<8x32xbf16>, vector<32x32xbf16>, vector<8x32xf32> -> vector<8x32xf32>
    %c0_38 = arith.constant 0 : index
    %c0_39 = arith.constant 0 : index
    %c0_40 = arith.constant 0 : index
    %128 = vector.load %arg7[%c0_38, %c0_39, %c0_40] : memref<1x1x32xf32, #tpu.memory_space<vmem>>, vector<1x1x32xf32>
    %129 = vector.shape_cast %128 : vector<1x1x32xf32> to vector<1x32xf32>
    %130 = vector.broadcast %129 : vector<1x32xf32> to vector<8x32xf32>
    %131 = arith.addf %127, %130 : vector<8x32xf32>
    %132 = arith.addf %4, %131 : vector<8x32xf32>
    %cst_41 = arith.constant dense<0.000000e+00> : vector<8xf32>
    %133 = vector.multi_reduction <add>, %132, %cst_41 [1] : vector<8x32xf32> to vector<8xf32>
    %134 = vector.shape_cast %133 : vector<8xf32> to vector<8x1xf32>
    %cst_42 = arith.constant 3.200000e+01 : f32
    %135 = vector.broadcast %cst_42 : f32 to vector<8x1xf32>
    %136 = arith.divf %134, %135 : vector<8x1xf32>
    %137 = vector.broadcast %136 : vector<8x1xf32> to vector<8x32xf32>
    %138 = arith.subf %132, %137 : vector<8x32xf32>
    %139 = arith.mulf %138, %138 : vector<8x32xf32>
    %cst_43 = arith.constant dense<0.000000e+00> : vector<8xf32>
    %140 = vector.multi_reduction <add>, %139, %cst_43 [1] : vector<8x32xf32> to vector<8xf32>
    %141 = vector.shape_cast %140 : vector<8xf32> to vector<8x1xf32>
    %cst_44 = arith.constant 3.200000e+01 : f32
    %142 = vector.broadcast %cst_44 : f32 to vector<8x1xf32>
    %143 = arith.divf %141, %142 : vector<8x1xf32>
    %144 = vector.broadcast %136 : vector<8x1xf32> to vector<8x32xf32>
    %145 = arith.subf %132, %144 : vector<8x32xf32>
    %cst_45 = arith.constant 9.99999974E-6 : f32
    %146 = vector.broadcast %cst_45 : f32 to vector<8x1xf32>
    %147 = arith.addf %143, %146 : vector<8x1xf32>
    %148 = math.rsqrt %147 : vector<8x1xf32>
    %149 = vector.broadcast %148 : vector<8x1xf32> to vector<8x32xf32>
    %150 = arith.mulf %145, %149 : vector<8x32xf32>
    %c0_46 = arith.constant 0 : index
    %c0_47 = arith.constant 0 : index
    %c0_48 = arith.constant 0 : index
    %151 = vector.load %arg8[%c0_46, %c0_47, %c0_48] : memref<1x1x32xf32, #tpu.memory_space<vmem>>, vector<1x1x32xf32>
    %152 = vector.shape_cast %151 : vector<1x1x32xf32> to vector<1x32xf32>
    %153 = vector.broadcast %152 : vector<1x32xf32> to vector<8x32xf32>
    %154 = arith.mulf %150, %153 : vector<8x32xf32>
    %c0_49 = arith.constant 0 : index
    %c0_50 = arith.constant 0 : index
    %c0_51 = arith.constant 0 : index
    %155 = vector.load %arg9[%c0_49, %c0_50, %c0_51] : memref<1x1x32xf32, #tpu.memory_space<vmem>>, vector<1x1x32xf32>
    %156 = vector.shape_cast %155 : vector<1x1x32xf32> to vector<1x32xf32>
    %157 = vector.broadcast %156 : vector<1x32xf32> to vector<8x32xf32>
    %158 = arith.addf %154, %157 : vector<8x32xf32>
    %159 = arith.truncf %158 : vector<8x32xf32> to vector<8x32xbf16>
    %c0_52 = arith.constant 0 : index
    %c0_53 = arith.constant 0 : index
    %c0_54 = arith.constant 0 : index
    %160 = vector.load %arg10[%c0_52, %c0_53, %c0_54] : memref<1x32x64xbf16, #tpu.memory_space<vmem>>, vector<1x32x64xbf16>
    %161 = vector.shape_cast %160 : vector<1x32x64xbf16> to vector<32x64xbf16>
    %cst_55 = arith.constant dense<0.000000e+00> : vector<8x64xf32>
    %162 = tpu.matmul %159, %161, %cst_55 {dimension_numbers = #tpu.dot_dimension_numbers<[1], [0], [0], [1], [0, 0, 1, 1], [], []>} : vector<8x32xbf16>, vector<32x64xbf16>, vector<8x64xf32> -> vector<8x64xf32>
    %c0_56 = arith.constant 0 : index
    %c0_57 = arith.constant 0 : index
    %c0_58 = arith.constant 0 : index
    %163 = vector.load %arg11[%c0_56, %c0_57, %c0_58] : memref<1x1x64xf32, #tpu.memory_space<vmem>>, vector<1x1x64xf32>
    %164 = vector.shape_cast %163 : vector<1x1x64xf32> to vector<1x64xf32>
    %165 = vector.broadcast %164 : vector<1x64xf32> to vector<8x64xf32>
    %166 = arith.addf %162, %165 : vector<8x64xf32>
    %cst_59 = arith.constant 0.000000e+00 : f32
    %167 = vector.broadcast %cst_59 : f32 to vector<8x64xf32>
    %168 = arith.maximumf %166, %167 : vector<8x64xf32>
    %169 = arith.truncf %168 : vector<8x64xf32> to vector<8x64xbf16>
    %c0_60 = arith.constant 0 : index
    %c0_61 = arith.constant 0 : index
    %c0_62 = arith.constant 0 : index
    %170 = vector.load %arg12[%c0_60, %c0_61, %c0_62] : memref<1x64x32xbf16, #tpu.memory_space<vmem>>, vector<1x64x32xbf16>
    %171 = vector.shape_cast %170 : vector<1x64x32xbf16> to vector<64x32xbf16>
    %cst_63 = arith.constant dense<0.000000e+00> : vector<8x32xf32>
    %172 = tpu.matmul %169, %171, %cst_63 {dimension_numbers = #tpu.dot_dimension_numbers<[1], [0], [0], [1], [0, 0, 1, 1], [], []>} : vector<8x64xbf16>, vector<64x32xbf16>, vector<8x32xf32> -> vector<8x32xf32>
    %c0_64 = arith.constant 0 : index
    %c0_65 = arith.constant 0 : index
    %c0_66 = arith.constant 0 : index
    %173 = vector.load %arg13[%c0_64, %c0_65, %c0_66] : memref<1x1x32xf32, #tpu.memory_space<vmem>>, vector<1x1x32xf32>
    %174 = vector.shape_cast %173 : vector<1x1x32xf32> to vector<1x32xf32>
    %175 = vector.broadcast %174 : vector<1x32xf32> to vector<8x32xf32>
    %176 = arith.addf %172, %175 : vector<8x32xf32>
    %177 = arith.addf %158, %176 : vector<8x32xf32>
    %cst_67 = arith.constant dense<0.000000e+00> : vector<8xf32>
    %178 = vector.multi_reduction <add>, %177, %cst_67 [1] : vector<8x32xf32> to vector<8xf32>
    %179 = vector.shape_cast %178 : vector<8xf32> to vector<8x1xf32>
    %cst_68 = arith.constant 3.200000e+01 : f32
    %180 = vector.broadcast %cst_68 : f32 to vector<8x1xf32>
    %181 = arith.divf %179, %180 : vector<8x1xf32>
    %182 = vector.broadcast %181 : vector<8x1xf32> to vector<8x32xf32>
    %183 = arith.subf %177, %182 : vector<8x32xf32>
    %184 = arith.mulf %183, %183 : vector<8x32xf32>
    %cst_69 = arith.constant dense<0.000000e+00> : vector<8xf32>
    %185 = vector.multi_reduction <add>, %184, %cst_69 [1] : vector<8x32xf32> to vector<8xf32>
    %186 = vector.shape_cast %185 : vector<8xf32> to vector<8x1xf32>
    %cst_70 = arith.constant 3.200000e+01 : f32
    %187 = vector.broadcast %cst_70 : f32 to vector<8x1xf32>
    %188 = arith.divf %186, %187 : vector<8x1xf32>
    %189 = vector.broadcast %181 : vector<8x1xf32> to vector<8x32xf32>
    %190 = arith.subf %177, %189 : vector<8x32xf32>
    %cst_71 = arith.constant 9.99999974E-6 : f32
    %191 = vector.broadcast %cst_71 : f32 to vector<8x1xf32>
    %192 = arith.addf %188, %191 : vector<8x1xf32>
    %193 = math.rsqrt %192 : vector<8x1xf32>
    %194 = vector.broadcast %193 : vector<8x1xf32> to vector<8x32xf32>
    %195 = arith.mulf %190, %194 : vector<8x32xf32>
    %c0_72 = arith.constant 0 : index
    %c0_73 = arith.constant 0 : index
    %c0_74 = arith.constant 0 : index
    %196 = vector.load %arg14[%c0_72, %c0_73, %c0_74] : memref<1x1x32xf32, #tpu.memory_space<vmem>>, vector<1x1x32xf32>
    %197 = vector.shape_cast %196 : vector<1x1x32xf32> to vector<1x32xf32>
    %198 = vector.broadcast %197 : vector<1x32xf32> to vector<8x32xf32>
    %199 = arith.mulf %195, %198 : vector<8x32xf32>
    %c0_75 = arith.constant 0 : index
    %c0_76 = arith.constant 0 : index
    %c0_77 = arith.constant 0 : index
    %200 = vector.load %arg15[%c0_75, %c0_76, %c0_77] : memref<1x1x32xf32, #tpu.memory_space<vmem>>, vector<1x1x32xf32>
    %201 = vector.shape_cast %200 : vector<1x1x32xf32> to vector<1x32xf32>
    %202 = vector.broadcast %201 : vector<1x32xf32> to vector<8x32xf32>
    %203 = arith.addf %199, %202 : vector<8x32xf32>
    %204 = vector.shape_cast %203 : vector<8x32xf32> to vector<1x8x32xf32>
    %c0_78 = arith.constant 0 : index
    %c0_79 = arith.constant 0 : index
    %c0_80 = arith.constant 0 : index
    %205 = vector.load %arg19[%c0_78, %c0_79, %c0_80] : memref<1x8x32xf32, #tpu.memory_space<vmem>>, vector<1x8x32xf32>
    tpu.vector_store %arg19[%c0_78, %c0_79, %c0_80], %204 {strides = array<i32>} : memref<1x8x32xf32, #tpu.memory_space<vmem>>, vector<1x8x32xf32>,
    %c1_i32 = arith.constant 1 : i32
    %206 = arith.cmpi eq, %arg1, %c1_i32 : i32
    %207 = arith.extui %206 : i1 to i32
    %c0_i32_81 = arith.constant 0 : i32
    %208 = arith.cmpi ne, %207, %c0_i32_81 : i32
    scf.if %208 {
      %209 = arith.truncf %203 : vector<8x32xf32> to vector<8x32xbf16>
      %c0_82 = arith.constant 0 : index
      %c0_83 = arith.constant 0 : index
      %210 = vector.load %arg16[%c0_82, %c0_83] : memref<32x16xbf16, #tpu.memory_space<vmem>>, vector<32x16xbf16>
      %cst_84 = arith.constant dense<0.000000e+00> : vector<8x16xf32>
      %211 = tpu.matmul %209, %210, %cst_84 {dimension_numbers = #tpu.dot_dimension_numbers<[1], [0], [0], [1], [0, 0, 1, 1], [], []>} : vector<8x32xbf16>, vector<32x16xbf16>, vector<8x16xf32> -> vector<8x16xf32>
      %c0_85 = arith.constant 0 : index
      %c0_86 = arith.constant 0 : index
      %212 = vector.load %arg17[%c0_85, %c0_86] : memref<1x16xf32, #tpu.memory_space<vmem>>, vector<1x16xf32>
      %213 = vector.broadcast %212 : vector<1x16xf32> to vector<8x16xf32>
      %214 = arith.addf %211, %213 : vector<8x16xf32>
      %215 = vector.shape_cast %214 : vector<8x16xf32> to vector<1x8x16xf32>
      %216 = vector.shape_cast %215 : vector<1x8x16xf32> to vector<8x16xf32>
      %217 = tpu.transpose %216, [1, 0] : vector<8x16xf32> -> vector<16x8xf32>
      %c0_87 = arith.constant 0 : index
      %c0_88 = arith.constant 0 : index
      %c0_89 = arith.constant 0 : index
      %218 = vector.load %arg18[%c0_87, %c0_88, %c0_89] : memref<1x16x8xf32, #tpu.memory_space<vmem>>, vector<1x16x8xf32>
      %219 = vector.shape_cast %218 : vector<1x16x8xf32> to vector<16x8xf32>
      %220 = vector.shape_cast %217 : vector<16x8xf32> to vector<1x16x8xf32>
      tpu.vector_store %arg18[%c0_87, %c0_88, %c0_89], %220 {strides = array<i32>} : memref<1x16x8xf32, #tpu.memory_space<vmem>>, vector<1x16x8xf32>,
    } else {
    }
    return
  }
  func.func @transform_0(%arg0: i32, %arg1: i32) -> (i32, i32, i32) {
    %c0_i32 = arith.constant 0 : i32
    %c0_i32_0 = arith.constant 0 : i32
    %c0_i32_1 = arith.constant 0 : i32
    return %arg0, %c0_i32, %c0_i32_0 : i32, i32, i32
  }
  func.func @transform_1(%arg0: i32, %arg1: i32) -> (i32, i32) {
    %c0_i32 = arith.constant 0 : i32
    %c0_i32_0 = arith.constant 0 : i32
    %c0_i32_1 = arith.constant 0 : i32
    return %c0_i32, %c0_i32_0 : i32, i32
  }
  func.func @transform_2(%arg0: i32, %arg1: i32) -> (i32, i32, i32) {
    %c0_i32 = arith.constant 0 : i32
    %c0_i32_0 = arith.constant 0 : i32
    %c0_i32_1 = arith.constant 0 : i32
    return %arg1, %c0_i32, %c0_i32_0 : i32, i32, i32
  }
  func.func @transform_3(%arg0: i32, %arg1: i32) -> (i32, i32, i32) {
    %c0_i32 = arith.constant 0 : i32
    %c0_i32_0 = arith.constant 0 : i32
    %c0_i32_1 = arith.constant 0 : i32
    return %arg1, %c0_i32, %c0_i32_0 : i32, i32, i32
  }
  func.func @transform_4(%arg0: i32, %arg1: i32) -> (i32, i32, i32) {
    %c0_i32 = arith.constant 0 : i32
    %c0_i32_0 = arith.constant 0 : i32
    %c0_i32_1 = arith.constant 0 : i32
    return %arg1, %c0_i32, %c0_i32_0 : i32, i32, i32
  }
  func.func @transform_5(%arg0: i32, %arg1: i32) -> (i32, i32, i32) {
    %c0_i32 = arith.constant 0 : i32
    %c0_i32_0 = arith.constant 0 : i32
    %c0_i32_1 = arith.constant 0 : i32
    return %arg1, %c0_i32, %c0_i32_0 : i32, i32, i32
  }
  func.func @transform_6(%arg0: i32, %arg1: i32) -> (i32, i32, i32) {
    %c0_i32 = arith.constant 0 : i32
    %c0_i32_0 = arith.constant 0 : i32
    %c0_i32_1 = arith.constant 0 : i32
    return %arg1, %c0_i32, %c0_i32_0 : i32, i32, i32
  }
  func.func @transform_7(%arg0: i32, %arg1: i32) -> (i32, i32, i32) {
    %c0_i32 = arith.constant 0 : i32
    %c0_i32_0 = arith.constant 0 : i32
    %c0_i32_1 = arith.constant 0 : i32
    return %arg1, %c0_i32, %c0_i32_0 : i32, i32, i32
  }
  func.func @transform_8(%arg0: i32, %arg1: i32) -> (i32, i32, i32) {
    %c0_i32 = arith.constant 0 : i32
    %c0_i32_0 = arith.constant 0 : i32
    %c0_i32_1 = arith.constant 0 : i32
    return %arg1, %c0_i32, %c0_i32_0 : i32, i32, i32
  }
  func.func @transform_9(%arg0: i32, %arg1: i32) -> (i32, i32, i32) {
    %c0_i32 = arith.constant 0 : i32
    %c0_i32_0 = arith.constant 0 : i32
    %c0_i32_1 = arith.constant 0 : i32
    return %arg1, %c0_i32, %c0_i32_0 : i32, i32, i32
  }
  func.func @transform_10(%arg0: i32, %arg1: i32) -> (i32, i32, i32) {
    %c0_i32 = arith.constant 0 : i32
    %c0_i32_0 = arith.constant 0 : i32
    %c0_i32_1 = arith.constant 0 : i32
    return %arg1, %c0_i32, %c0_i32_0 : i32, i32, i32
  }
  func.func @transform_11(%arg0: i32, %arg1: i32) -> (i32, i32, i32) {
    %c0_i32 = arith.constant 0 : i32
    %c0_i32_0 = arith.constant 0 : i32
    %c0_i32_1 = arith.constant 0 : i32
    return %arg1, %c0_i32, %c0_i32_0 : i32, i32, i32
  }
  func.func @transform_12(%arg0: i32, %arg1: i32) -> (i32, i32, i32) {
    %c0_i32 = arith.constant 0 : i32
    %c0_i32_0 = arith.constant 0 : i32
    %c0_i32_1 = arith.constant 0 : i32
    return %arg1, %c0_i32, %c0_i32_0 : i32, i32, i32
  }
  func.func @transform_13(%arg0: i32, %arg1: i32) -> (i32, i32, i32) {
    %c0_i32 = arith.constant 0 : i32
    %c0_i32_0 = arith.constant 0 : i32
    %c0_i32_1 = arith.constant 0 : i32
    return %arg1, %c0_i32, %c0_i32_0 : i32, i32, i32
  }
  func.func @transform_14(%arg0: i32, %arg1: i32) -> (i32, i32) {
    %c0_i32 = arith.constant 0 : i32
    %c0_i32_0 = arith.constant 0 : i32
    %c0_i32_1 = arith.constant 0 : i32
    return %c0_i32, %c0_i32_0 : i32, i32
  }
  func.func @transform_15(%arg0: i32, %arg1: i32) -> (i32, i32) {
    %c0_i32 = arith.constant 0 : i32
    %c0_i32_0 = arith.constant 0 : i32
    %c0_i32_1 = arith.constant 0 : i32
    return %c0_i32, %c0_i32_0 : i32, i32
  }
  func.func @transform_16(%arg0: i32, %arg1: i32) -> (i32, i32, i32) {
    %c0_i32 = arith.constant 0 : i32
    %c0_i32_0 = arith.constant 0 : i32
    %c0_i32_1 = arith.constant 0 : i32
    return %arg0, %c0_i32, %c0_i32_0 : i32, i32, i32
  }
}

</mosaic_0001>

<llo_original>
// kernel: lsm_transformer_forward.1
$region0: #{lsm_transformer_forward.1}
  #allocation0 [shape = 'u32[]', space=smem, size = 0x4, offset = 0x4, fixed_abs, tag = 'smem constant byte address 0x4 - core index']
  #allocation1 [shape = 'u32[72,128]{1,0:T(1,128)}', space=vmem, size = 0x9000, scoped, tag = 'internal scratch']
  #allocation2 [shape = 'f32[1,8,32]{2,1,0:T(8,128)}', space=vmem, size = 0x1000, scoped, tag = 'scratch operand']
  #allocation3 [shape = 'f32[8,32]{1,0:T(8,128)}', space=vmem, size = 0x1000, scoped, tag = 'scratch operand']
  %s0 = inlined_call_operand.vmem [shape: f32[2,32,8], index: 0, kind: input, shape index: {}]
  %s1 = inlined_call_operand.vmem [shape: f32[8,32], index: 1, kind: input, shape index: {}]
  %s2 = inlined_call_operand.vmem [shape: bf16[2,32,96], index: 2, kind: input, shape index: {}]
  %s3 = inlined_call_operand.vmem [shape: f32[2,1,96], index: 3, kind: input, shape index: {}]
  %s4 = inlined_call_operand.vmem [shape: bf16[2,32,32], index: 4, kind: input, shape index: {}]
  %s5 = inlined_call_operand.vmem [shape: f32[2,1,32], index: 5, kind: input, shape index: {}]
  %s6 = inlined_call_operand.vmem [shape: f32[2,1,32], index: 6, kind: input, shape index: {}]
  %s7 = inlined_call_operand.vmem [shape: f32[2,1,32], index: 7, kind: input, shape index: {}]
  %s8 = inlined_call_operand.vmem [shape: bf16[2,32,64], index: 8, kind: input, shape index: {}]
  %s9 = inlined_call_operand.vmem [shape: f32[2,1,64], index: 9, kind: input, shape index: {}]
  %s10 = inlined_call_operand.vmem [shape: bf16[2,64,32], index: 10, kind: input, shape index: {}]
  %s11 = inlined_call_operand.vmem [shape: f32[2,1,32], index: 11, kind: input, shape index: {}]
  %s12 = inlined_call_operand.vmem [shape: f32[2,1,32], index: 12, kind: input, shape index: {}]
  %s13 = inlined_call_operand.vmem [shape: f32[2,1,32], index: 13, kind: input, shape index: {}]
  %s14 = inlined_call_operand.vmem [shape: bf16[32,16], index: 14, kind: input, shape index: {}]
  %s15 = inlined_call_operand.vmem [shape: f32[1,16], index: 15, kind: input, shape index: {}]
  %s16 = inlined_call_operand.vmem [shape: f32[2,16,8], index: 16, kind: output, shape index: {}]
  %s17 = sld [smem:[#allocation0]]
  $region105: #{lsm_transformer_forward.1} parent=0
    _
  %s19 = ssub.s32 1, %s17
  %s20 = scalar_select 0, %s19, %s17
  loop: start=0, step=1, limit=6
  $region2: #{lsm_transformer_forward.1} parent=0 // loop_pre_header
    _
  $region3: #{lsm_transformer_forward.1} parent=0 // loop_header
    %s22 = sphi 0, %s26
    %p23 = scmp.ge.s32.totalorder %s22, 6
    %s29 = sphi 0, %s41
    %s30 = sphi 0, %s37
    %s31 = sphi 0, %s29
    %s32 = sphi 0, %s30
    %s33 = sphi 0, %s31
    %s34 = sphi 0, %s32
    %s44 = sphi 0, %s46
    %s47 = sphi 0, %s44
    %s48 = sphi 0, %s47
    %s64 = sphi 0, %s48
    %s68 = sphi 0, %s68
    %s70 = sphi 0, %s68
    %s71 = sphi 0, %s70
    %s85 = sphi 0, %s71
    %s91 = sphi 0, %s93
    %s94 = sphi 0, %s91
    %s95 = sphi 0, %s94
    %s111 = sphi 0, %s95
    %s117 = sphi 0, %s119
    %s120 = sphi 0, %s117
    %s121 = sphi 0, %s120
    %s137 = sphi 0, %s121
    %s143 = sphi 0, %s145
    %s146 = sphi 0, %s143
    %s147 = sphi 0, %s146
    %s163 = sphi 0, %s147
    %s169 = sphi 0, %s171
    %s172 = sphi 0, %s169
    %s173 = sphi 0, %s172
    %s189 = sphi 0, %s173
    %s195 = sphi 0, %s197
    %s198 = sphi 0, %s195
    %s199 = sphi 0, %s198
    %s215 = sphi 0, %s199
    %s221 = sphi 0, %s223
    %s224 = sphi 0, %s221
    %s225 = sphi 0, %s224
    %s241 = sphi 0, %s225
    %s247 = sphi 0, %s249
    %s250 = sphi 0, %s247
    %s251 = sphi 0, %s250
    %s267 = sphi 0, %s251
    %s273 = sphi 0, %s275
    %s276 = sphi 0, %s273
    %s277 = sphi 0, %s276
    %s293 = sphi 0, %s277
    %s299 = sphi 0, %s301
    %s302 = sphi 0, %s299
    %s303 = sphi 0, %s302
    %s319 = sphi 0, %s303
    %s325 = sphi 0, %s327
    %s328 = sphi 0, %s325
    %s329 = sphi 0, %s328
    %s345 = sphi 0, %s329
    %s351 = sphi 0, %s353
    %s354 = sphi 0, %s351
    %s355 = sphi 0, %s354
    %s371 = sphi 0, %s355
    %s377 = sphi 0, %s379
    %s380 = sphi 0, %s377
    %s381 = sphi 0, %s380
    %s397 = sphi 0, %s381
    %s401 = sphi 0, %s401
    %s403 = sphi 0, %s401
    %s404 = sphi 0, %s403
    %s418 = sphi 0, %s404
    %s422 = sphi 0, %s422
    %s424 = sphi 0, %s422
    %s425 = sphi 0, %s424
    %s439 = sphi 0, %s425
    %s445 = sphi 0, %s447
    %s448 = sphi 0, %s445
    %s449 = sphi 0, %s448
    %s465 = sphi 0, %s449
  $region4: #{lsm_transformer_forward.1} parent=0 // loop_header_branch
    %25 = sbr.rel (%p23) target = $region8
  $region5: #{lsm_transformer_forward.1} parent=0 // loop_body
    %s27 = ssub.s32 %s22, 1
    %s28 = ssub.s32 %s22, 2
    %s35 = sadd.s32 1, %s30
    %p36 = scmp.ge.s32.totalorder %s35, 2
    %s37 = scalar_select %p36, 0, %s35
    %s38 = sadd.s32 1, %s29
    %s39 = scalar_select %p36, %s38, %s29
    %p40 = scmp.ge.s32.totalorder %s39, 2
    %s41 = scalar_select %p40, 0, %s39
    %s42 = ssub.s32 %s29, %s41
    %p43 = scmp.eq.s32.totalorder %s42, 0
    %s45 = sadd.s32 %s44, 1
    %s46 = scalar_select %p43, %s44, %s45
    %p49 = pneg %p43
    %p50 = scmp.eq.s32.totalorder %s22, 3
    %p51 = por %p49, %p50
    %p52 = scmp.ne.s32.totalorder %s44, %s47
    %p53 = scmp.eq.s32.totalorder %s22, 0
    %p54 = por %p52, %p53
    %p55 = scmp.ne.s32.totalorder %s44, %s47
    %p56 = scmp.eq.s32.totalorder %s27, 3
    %p57 = por %p55, %p56
    %p58 = scmp.ne.s32.totalorder %s47, %s48
    %p59 = scmp.eq.s32.totalorder %s27, 0
    %p60 = por %p58, %p59
    %p61 = scmp.ne.s32.totalorder %s47, %s48
    %p62 = scmp.eq.s32.totalorder %s28, 3
    %p63 = por %p61, %p62
    %p65 = scmp.ne.s32.totalorder %s48, %s64
    %p66 = scmp.eq.s32.totalorder %s28, 0
    %p67 = por %p65, %p66
    %s69 = sadd.s32 %s68, 1
    %p72 = scmp.eq.s32.totalorder %s22, 3
    %p73 = scmp.ne.s32.totalorder %s68, %s70
    %p74 = scmp.eq.s32.totalorder %s22, 0
    %p75 = por %p73, %p74
    %p76 = scmp.ne.s32.totalorder %s68, %s70
    %p77 = scmp.eq.s32.totalorder %s27, 3
    %p78 = por %p76, %p77
    %p79 = scmp.ne.s32.totalorder %s70, %s71
    %p80 = scmp.eq.s32.totalorder %s27, 0
    %p81 = por %p79, %p80
    %p82 = scmp.ne.s32.totalorder %s70, %s71
    %p83 = scmp.eq.s32.totalorder %s28, 3
    %p84 = por %p82, %p83
    %p86 = scmp.ne.s32.totalorder %s71, %s85
    %p87 = scmp.eq.s32.totalorder %s28, 0
    %p88 = por %p86, %p87
    %s89 = ssub.s32 %s30, %s37
    %p90 = scmp.eq.s32.totalorder %s89, 0
    %s92 = sadd.s32 %s91, 1
    %s93 = scalar_select %p90, %s91, %s92
    %p96 = pneg %p90
    %p97 = scmp.eq.s32.totalorder %s22, 3
    %p98 = por %p96, %p97
    %p99 = scmp.ne.s32.totalorder %s91, %s94
    %p100 = scmp.eq.s32.totalorder %s22, 0
    %p101 = por %p99, %p100
    %p102 = scmp.ne.s32.totalorder %s91, %s94
    %p103 = scmp.eq.s32.totalorder %s27, 3
    %p104 = por %p102, %p103
    %p105 = scmp.ne.s32.totalorder %s94, %s95
    %p106 = scmp.eq.s32.totalorder %s27, 0
    %p107 = por %p105, %p106
    %p108 = scmp.ne.s32.totalorder %s94, %s95
    %p109 = scmp.eq.s32.totalorder %s28, 3
    %p110 = por %p108, %p109
    %p112 = scmp.ne.s32.totalorder %s95, %s111
    %p113 = scmp.eq.s32.totalorder %s28, 0
    %p114 = por %p112, %p113
    %s115 = ssub.s32 %s30, %s37
    %p116 = scmp.eq.s32.totalorder %s115, 0
    %s118 = sadd.s32 %s117, 1
    %s119 = scalar_select %p116, %s117, %s118
    %p122 = pneg %p116
    %p123 = scmp.eq.s32.totalorder %s22, 3
    %p124 = por %p122, %p123
    %p125 = scmp.ne.s32.totalorder %s117, %s120
    %p126 = scmp.eq.s32.totalorder %s22, 0
    %p127 = por %p125, %p126
    %p128 = scmp.ne.s32.totalorder %s117, %s120
    %p129 = scmp.eq.s32.totalorder %s27, 3
    %p130 = por %p128, %p129
    %p131 = scmp.ne.s32.totalorder %s120, %s121
    %p132 = scmp.eq.s32.totalorder %s27, 0
    %p133 = por %p131, %p132
    %p134 = scmp.ne.s32.totalorder %s120, %s121
    %p135 = scmp.eq.s32.totalorder %s28, 3
    %p136 = por %p134, %p135
    %p138 = scmp.ne.s32.totalorder %s121, %s137
    %p139 = scmp.eq.s32.totalorder %s28, 0
    %p140 = por %p138, %p139
    %s141 = ssub.s32 %s30, %s37
    %p142 = scmp.eq.s32.totalorder %s141, 0
    %s144 = sadd.s32 %s143, 1
    %s145 = scalar_select %p142, %s143, %s144
    %p148 = pneg %p142
    %p149 = scmp.eq.s32.totalorder %s22, 3
    %p150 = por %p148, %p149
    %p151 = scmp.ne.s32.totalorder %s143, %s146
    %p152 = scmp.eq.s32.totalorder %s22, 0
    %p153 = por %p151, %p152
    %p154 = scmp.ne.s32.totalorder %s143, %s146
    %p155 = scmp.eq.s32.totalorder %s27, 3
    %p156 = por %p154, %p155
    %p157 = scmp.ne.s32.totalorder %s146, %s147
    %p158 = scmp.eq.s32.totalorder %s27, 0
    %p159 = por %p157, %p158
    %p160 = scmp.ne.s32.totalorder %s146, %s147
    %p161 = scmp.eq.s32.totalorder %s28, 3
    %p162 = por %p160, %p161
    %p164 = scmp.ne.s32.totalorder %s147, %s163
    %p165 = scmp.eq.s32.totalorder %s28, 0
    %p166 = por %p164, %p165
    %s167 = ssub.s32 %s30, %s37
    %p168 = scmp.eq.s32.totalorder %s167, 0
    %s170 = sadd.s32 %s169, 1
    %s171 = scalar_select %p168, %s169, %s170
    %p174 = pneg %p168
    %p175 = scmp.eq.s32.totalorder %s22, 3
    %p176 = por %p174, %p175
    %p177 = scmp.ne.s32.totalorder %s169, %s172
    %p178 = scmp.eq.s32.totalorder %s22, 0
    %p179 = por %p177, %p178
    %p180 = scmp.ne.s32.totalorder %s169, %s172
    %p181 = scmp.eq.s32.totalorder %s27, 3
    %p182 = por %p180, %p181
    %p183 = scmp.ne.s32.totalorder %s172, %s173
    %p184 = scmp.eq.s32.totalorder %s27, 0
    %p185 = por %p183, %p184
    %p186 = scmp.ne.s32.totalorder %s172, %s173
    %p187 = scmp.eq.s32.totalorder %s28, 3
    %p188 = por %p186, %p187
    %p190 = scmp.ne.s32.totalorder %s173, %s189
    %p191 = scmp.eq.s32.totalorder %s28, 0
    %p192 = por %p190, %p191
    %s193 = ssub.s32 %s30, %s37
    %p194 = scmp.eq.s32.totalorder %s193, 0
    %s196 = sadd.s32 %s195, 1
    %s197 = scalar_select %p194, %s195, %s196
    %p200 = pneg %p194
    %p201 = scmp.eq.s32.totalorder %s22, 3
    %p202 = por %p200, %p201
    %p203 = scmp.ne.s32.totalorder %s195, %s198
    %p204 = scmp.eq.s32.totalorder %s22, 0
    %p205 = por %p203, %p204
    %p206 = scmp.ne.s32.totalorder %s195, %s198
    %p207 = scmp.eq.s32.totalorder %s27, 3
    %p208 = por %p206, %p207
    %p209 = scmp.ne.s32.totalorder %s198, %s199
    %p210 = scmp.eq.s32.totalorder %s27, 0
    %p211 = por %p209, %p210
    %p212 = scmp.ne.s32.totalorder %s198, %s199
    %p213 = scmp.eq.s32.totalorder %s28, 3
    %p214 = por %p212, %p213
    %p216 = scmp.ne.s32.totalorder %s199, %s215
    %p217 = scmp.eq.s32.totalorder %s28, 0
    %p218 = por %p216, %p217
    %s219 = ssub.s32 %s30, %s37
    %p220 = scmp.eq.s32.totalorder %s219, 0
    %s222 = sadd.s32 %s221, 1
    %s223 = scalar_select %p220, %s221, %s222
    %p226 = pneg %p220
    %p227 = scmp.eq.s32.totalorder %s22, 3
    %p228 = por %p226, %p227
    %p229 = scmp.ne.s32.totalorder %s221, %s224
    %p230 = scmp.eq.s32.totalorder %s22, 0
    %p231 = por %p229, %p230
    %p232 = scmp.ne.s32.totalorder %s221, %s224
    %p233 = scmp.eq.s32.totalorder %s27, 3
    %p234 = por %p232, %p233
    %p235 = scmp.ne.s32.totalorder %s224, %s225
    %p236 = scmp.eq.s32.totalorder %s27, 0
    %p237 = por %p235, %p236
    %p238 = scmp.ne.s32.totalorder %s224, %s225
    %p239 = scmp.eq.s32.totalorder %s28, 3
    %p240 = por %p238, %p239
    %p242 = scmp.ne.s32.totalorder %s225, %s241
    %p243 = scmp.eq.s32.totalorder %s28, 0
    %p244 = por %p242, %p243
    %s245 = ssub.s32 %s30, %s37
    %p246 = scmp.eq.s32.totalorder %s245, 0
    %s248 = sadd.s32 %s247, 1
    %s249 = scalar_select %p246, %s247, %s248
    %p252 = pneg %p246
    %p253 = scmp.eq.s32.totalorder %s22, 3
    %p254 = por %p252, %p253
    %p255 = scmp.ne.s32.totalorder %s247, %s250
    %p256 = scmp.eq.s32.totalorder %s22, 0
    %p257 = por %p255, %p256
    %p258 = scmp.ne.s32.totalorder %s247, %s250
    %p259 = scmp.eq.s32.totalorder %s27, 3
    %p260 = por %p258, %p259
    %p261 = scmp.ne.s32.totalorder %s250, %s251
    %p262 = scmp.eq.s32.totalorder %s27, 0
    %p263 = por %p261, %p262
    %p264 = scmp.ne.s32.totalorder %s250, %s251
    %p265 = scmp.eq.s32.totalorder %s28, 3
    %p266 = por %p264, %p265
    %p268 = scmp.ne.s32.totalorder %s251, %s267
    %p269 = scmp.eq.s32.totalorder %s28, 0
    %p270 = por %p268, %p269
    %s271 = ssub.s32 %s30, %s37
    %p272 = scmp.eq.s32.totalorder %s271, 0
    %s274 = sadd.s32 %s273, 1
    %s275 = scalar_select %p272, %s273, %s274
    %p278 = pneg %p272
    %p279 = scmp.eq.s32.totalorder %s22, 3
    %p280 = por %p278, %p279
    %p281 = scmp.ne.s32.totalorder %s273, %s276
    %p282 = scmp.eq.s32.totalorder %s22, 0
    %p283 = por %p281, %p282
    %p284 = scmp.ne.s32.totalorder %s273, %s276
    %p285 = scmp.eq.s32.totalorder %s27, 3
    %p286 = por %p284, %p285
    %p287 = scmp.ne.s32.totalorder %s276, %s277
    %p288 = scmp.eq.s32.totalorder %s27, 0
    %p289 = por %p287, %p288
    %p290 = scmp.ne.s32.totalorder %s276, %s277
    %p291 = scmp.eq.s32.totalorder %s28, 3
    %p292 = por %p290, %p291
    %p294 = scmp.ne.s32.totalorder %s277, %s293
    %p295 = scmp.eq.s32.totalorder %s28, 0
    %p296 = por %p294, %p295
    %s297 = ssub.s32 %s30, %s37
    %p298 = scmp.eq.s32.totalorder %s297, 0
    %s300 = sadd.s32 %s299, 1
    %s301 = scalar_select %p298, %s299, %s300
    %p304 = pneg %p298
    %p305 = scmp.eq.s32.totalorder %s22, 3
    %p306 = por %p304, %p305
    %p307 = scmp.ne.s32.totalorder %s299, %s302
    %p308 = scmp.eq.s32.totalorder %s22, 0
    %p309 = por %p307, %p308
    %p310 = scmp.ne.s32.totalorder %s299, %s302
    %p311 = scmp.eq.s32.totalorder %s27, 3
    %p312 = por %p310, %p311
    %p313 = scmp.ne.s32.totalorder %s302, %s303
    %p314 = scmp.eq.s32.totalorder %s27, 0
    %p315 = por %p313, %p314
    %p316 = scmp.ne.s32.totalorder %s302, %s303
    %p317 = scmp.eq.s32.totalorder %s28, 3
    %p318 = por %p316, %p317
    %p320 = scmp.ne.s32.totalorder %s303, %s319
    %p321 = scmp.eq.s32.totalorder %s28, 0
    %p322 = por %p320, %p321
    %s323 = ssub.s32 %s30, %s37
    %p324 = scmp.eq.s32.totalorder %s323, 0
    %s326 = sadd.s32 %s325, 1
    %s327 = scalar_select %p324, %s325, %s326
    %p330 = pneg %p324
    %p331 = scmp.eq.s32.totalorder %s22, 3
    %p332 = por %p330, %p331
    %p333 = scmp.ne.s32.totalorder %s325, %s328
    %p334 = scmp.eq.s32.totalorder %s22, 0
    %p335 = por %p333, %p334
    %p336 = scmp.ne.s32.totalorder %s325, %s328
    %p337 = scmp.eq.s32.totalorder %s27, 3
    %p338 = por %p336, %p337
    %p339 = scmp.ne.s32.totalorder %s328, %s329
    %p340 = scmp.eq.s32.totalorder %s27, 0
    %p341 = por %p339, %p340
    %p342 = scmp.ne.s32.totalorder %s328, %s329
    %p343 = scmp.eq.s32.totalorder %s28, 3
    %p344 = por %p342, %p343
    %p346 = scmp.ne.s32.totalorder %s329, %s345
    %p347 = scmp.eq.s32.totalorder %s28, 0
    %p348 = por %p346, %p347
    %s349 = ssub.s32 %s30, %s37
    %p350 = scmp.eq.s32.totalorder %s349, 0
    %s352 = sadd.s32 %s351, 1
    %s353 = scalar_select %p350, %s351, %s352
    %p356 = pneg %p350
    %p357 = scmp.eq.s32.totalorder %s22, 3
    %p358 = por %p356, %p357
    %p359 = scmp.ne.s32.totalorder %s351, %s354
    %p360 = scmp.eq.s32.totalorder %s22, 0
    %p361 = por %p359, %p360
    %p362 = scmp.ne.s32.totalorder %s351, %s354
    %p363 = scmp.eq.s32.totalorder %s27, 3
    %p364 = por %p362, %p363
    %p365 = scmp.ne.s32.totalorder %s354, %s355
    %p366 = scmp.eq.s32.totalorder %s27, 0
    %p367 = por %p365, %p366
    %p368 = scmp.ne.s32.totalorder %s354, %s355
    %p369 = scmp.eq.s32.totalorder %s28, 3
    %p370 = por %p368, %p369
    %p372 = scmp.ne.s32.totalorder %s355, %s371
    %p373 = scmp.eq.s32.totalorder %s28, 0
    %p374 = por %p372, %p373
    %s375 = ssub.s32 %s30, %s37
    %p376 = scmp.eq.s32.totalorder %s375, 0
    %s378 = sadd.s32 %s377, 1
    %s379 = scalar_select %p376, %s377, %s378
    %p382 = pneg %p376
    %p383 = scmp.eq.s32.totalorder %s22, 3
    %p384 = por %p382, %p383
    %p385 = scmp.ne.s32.totalorder %s377, %s380
    %p386 = scmp.eq.s32.totalorder %s22, 0
    %p387 = por %p385, %p386
    %p388 = scmp.ne.s32.totalorder %s377, %s380
    %p389 = scmp.eq.s32.totalorder %s27, 3
    %p390 = por %p388, %p389
    %p391 = scmp.ne.s32.totalorder %s380, %s381
    %p392 = scmp.eq.s32.totalorder %s27, 0
    %p393 = por %p391, %p392
    %p394 = scmp.ne.s32.totalorder %s380, %s381
    %p395 = scmp.eq.s32.totalorder %s28, 3
    %p396 = por %p394, %p395
    %p398 = scmp.ne.s32.totalorder %s381, %s397
    %p399 = scmp.eq.s32.totalorder %s28, 0
    %p400 = por %p398, %p399
    %s402 = sadd.s32 %s401, 1
    %p405 = scmp.eq.s32.totalorder %s22, 3
    %p406 = scmp.ne.s32.totalorder %s401, %s403
    %p407 = scmp.eq.s32.totalorder %s22, 0
    %p408 = por %p406, %p407
    %p409 = scmp.ne.s32.totalorder %s401, %s403
    %p410 = scmp.eq.s32.totalorder %s27, 3
    %p411 = por %p409, %p410
    %p412 = scmp.ne.s32.totalorder %s403, %s404
    %p413 = scmp.eq.s32.totalorder %s27, 0
    %p414 = por %p412, %p413
    %p415 = scmp.ne.s32.totalorder %s403, %s404
    %p416 = scmp.eq.s32.totalorder %s28, 3
    %p417 = por %p415, %p416
    %p419 = scmp.ne.s32.totalorder %s404, %s418
    %p420 = scmp.eq.s32.totalorder %s28, 0
    %p421 = por %p419, %p420
    %s423 = sadd.s32 %s422, 1
    %p426 = scmp.eq.s32.totalorder %s22, 3
    %p427 = scmp.ne.s32.totalorder %s422, %s424
    %p428 = scmp.eq.s32.totalorder %s22, 0
    %p429 = por %p427, %p428
    %p430 = scmp.ne.s32.totalorder %s422, %s424
    %p431 = scmp.eq.s32.totalorder %s27, 3
    %p432 = por %p430, %p431
    %p433 = scmp.ne.s32.totalorder %s424, %s425
    %p434 = scmp.eq.s32.totalorder %s27, 0
    %p435 = por %p433, %p434
    %p436 = scmp.ne.s32.totalorder %s424, %s425
    %p437 = scmp.eq.s32.totalorder %s28, 3
    %p438 = por %p436, %p437
    %p440 = scmp.ne.s32.totalorder %s425, %s439
    %p441 = scmp.eq.s32.totalorder %s28, 0
    %p442 = por %p440, %p441
    %s443 = ssub.s32 %s29, %s41
    %p444 = scmp.eq.s32.totalorder %s443, 0
    %s446 = sadd.s32 %s445, 1
    %s447 = scalar_select %p444, %s445, %s446
    %p450 = pneg %p444
    %p451 = scmp.eq.s32.totalorder %s22, 3
    %p452 = por %p450, %p451
    %p453 = scmp.ne.s32.totalorder %s445, %s448
    %p454 = scmp.eq.s32.totalorder %s22, 0
    %p455 = por %p453, %p454
    %p456 = scmp.ne.s32.totalorder %s445, %s448
    %p457 = scmp.eq.s32.totalorder %s27, 3
    %p458 = por %p456, %p457
    %p459 = scmp.ne.s32.totalorder %s448, %s449
    %p460 = scmp.eq.s32.totalorder %s27, 0
    %p461 = por %p459, %p460
    %p462 = scmp.ne.s32.totalorder %s448, %s449
    %p463 = scmp.eq.s32.totalorder %s28, 3
    %p464 = por %p462, %p463
    %p466 = scmp.ne.s32.totalorder %s449, %s465
    %p467 = scmp.eq.s32.totalorder %s28, 0
    %p468 = por %p466, %p467
    %p469 = scmp.le.s32.totalorder 1, %s22
    %p470 = scmp.lt.s32.totalorder %s22, 5
    %p471 = pnand %p469, %p470
    %p472 = pneg %p471
    // Predicated region
    $region9: #{lsm_transformer_forward.1} parent=5 // pred_check
      _
    $region10: #{lsm_transformer_forward.1} parent=5 // pred_check_branch
      %474 = sbr.rel (%p471) target = $region12
    $region11: #{lsm_transformer_forward.1} parent=5 // pred_region
      %s475 = ssub.s32 %s22, 1
      // Predicated region
      $region13: #{lsm_transformer_forward.1} parent=11 // pred_check
        %p476 = pneg %p81
      $region14: #{lsm_transformer_forward.1} parent=11 // pred_check_branch
        %478 = sbr.rel (%p476) target = $region16
      $region15: #{lsm_transformer_forward.1} parent=11 // pred_region
        _
      $region16: #{lsm_transformer_forward.1} parent=11 // pred_fallthru
        _
      // Predicated region
      $region17: #{lsm_transformer_forward.1} parent=11 // pred_check
        %p479 = pneg %p414
      $region18: #{lsm_transformer_forward.1} parent=11 // pred_check_branch
        %481 = sbr.rel (%p479) target = $region20
      $region19: #{lsm_transformer_forward.1} parent=11 // pred_region
        _
      $region20: #{lsm_transformer_forward.1} parent=11 // pred_fallthru
        _
      // Predicated region
      $region21: #{lsm_transformer_forward.1} parent=11 // pred_check
        %p482 = pneg %p435
      $region22: #{lsm_transformer_forward.1} parent=11 // pred_check_branch
        %484 = sbr.rel (%p482) target = $region24
      $region23: #{lsm_transformer_forward.1} parent=11 // pred_region
        _
      $region24: #{lsm_transformer_forward.1} parent=11 // pred_fallthru
        _
    $region12: #{lsm_transformer_forward.1} parent=5 // pred_fallthru
      _
    %p485 = scmp.lt.s32.totalorder %s22, 4
    // Predicated region
    $region25: #{lsm_transformer_forward.1} parent=5 // pred_check
      %p486 = pneg %p485
    $region26: #{lsm_transformer_forward.1} parent=5 // pred_check_branch
      %488 = sbr.rel (%p486) target = $region28
    $region27: #{lsm_transformer_forward.1} parent=5 // pred_region
      // Predicated region
      $region29: #{lsm_transformer_forward.1} parent=27 // pred_check
        %p489 = pneg %p54
      $region30: #{lsm_transformer_forward.1} parent=27 // pred_check_branch
        %491 = sbr.rel (%p489) target = $region32
      $region31: #{lsm_transformer_forward.1} parent=27 // pred_region
        %p492 = scmp.lt.s32.totalorder %s29, 1
        %s493 = scalar_select %p492, %s29, 1
        %s494 = smul.addr %s493, 4
        %s495 = smul.addr %s494, 8
        %s496 = scalar_lea.vmem %s0, %s495
      $region32: #{lsm_transformer_forward.1} parent=27 // pred_fallthru
        _
      // Predicated region
      $region33: #{lsm_transformer_forward.1} parent=27 // pred_check
        %p497 = pneg %p101
      $region34: #{lsm_transformer_forward.1} parent=27 // pred_check_branch
        %499 = sbr.rel (%p497) target = $region36
      $region35: #{lsm_transformer_forward.1} parent=27 // pred_region
        %p500 = scmp.lt.s32.totalorder %s30, 1
        %s501 = scalar_select %p500, %s30, 1
        %s502 = smul.addr %s501, 4
        %s503 = smul.addr %s502, 4
        %s504 = scalar_lea.vmem %s2, %s503
      $region36: #{lsm_transformer_forward.1} parent=27 // pred_fallthru
        _
      // Predicated region
      $region37: #{lsm_transformer_forward.1} parent=27 // pred_check
        %p505 = pneg %p127
      $region38: #{lsm_transformer_forward.1} parent=27 // pred_check_branch
        %507 = sbr.rel (%p505) target = $region40
      $region39: #{lsm_transformer_forward.1} parent=27 // pred_region
        %p508 = scmp.lt.s32.totalorder %s30, 1
        %s509 = scalar_select %p508, %s30, 1
        %s510 = scalar_lea.vmem %s3, %s509
      $region40: #{lsm_transformer_forward.1} parent=27 // pred_fallthru
        _
      // Predicated region
      $region41: #{lsm_transformer_forward.1} parent=27 // pred_check
        %p511 = pneg %p153
      $region42: #{lsm_transformer_forward.1} parent=27 // pred_check_branch
        %513 = sbr.rel (%p511) target = $region44
      $region43: #{lsm_transformer_forward.1} parent=27 // pred_region
        %p514 = scmp.lt.s32.totalorder %s30, 1
        %s515 = scalar_select %p514, %s30, 1
        %s516 = smul.addr %s515, 4
        %s517 = smul.addr %s516, 4
        %s518 = scalar_lea.vmem %s4, %s517
      $region44: #{lsm_transformer_forward.1} parent=27 // pred_fallthru
        _
      // Predicated region
      $region45: #{lsm_transformer_forward.1} parent=27 // pred_check
        %p519 = pneg %p179
      $region46: #{lsm_transformer_forward.1} parent=27 // pred_check_branch
        %521 = sbr.rel (%p519) target = $region48
      $region47: #{lsm_transformer_forward.1} parent=27 // pred_region
        %p522 = scmp.lt.s32.totalorder %s30, 1
        %s523 = scalar_select %p522, %s30, 1
        %s524 = scalar_lea.vmem %s5, %s523
      $region48: #{lsm_transformer_forward.1} parent=27 // pred_fallthru
        _
      // Predicated region
      $region49: #{lsm_transformer_forward.1} parent=27 // pred_check
        %p525 = pneg %p205
      $region50: #{lsm_transformer_forward.1} parent=27 // pred_check_branch
        %527 = sbr.rel (%p525) target = $region52
      $region51: #{lsm_transformer_forward.1} parent=27 // pred_region
        %p528 = scmp.lt.s32.totalorder %s30, 1
        %s529 = scalar_select %p528, %s30, 1
        %s530 = scalar_lea.vmem %s6, %s529
      $region52: #{lsm_transformer_forward.1} parent=27 // pred_fallthru
        _
      // Predicated region
      $region53: #{lsm_transformer_forward.1} parent=27 // pred_check
        %p531 = pneg %p231
      $region54: #{lsm_transformer_forward.1} parent=27 // pred_check_branch
        %533 = sbr.rel (%p531) target = $region56
      $region55: #{lsm_transformer_forward.1} parent=27 // pred_region
        %p534 = scmp.lt.s32.totalorder %s30, 1
        %s535 = scalar_select %p534, %s30, 1
        %s536 = scalar_lea.vmem %s7, %s535
      $region56: #{lsm_transformer_forward.1} parent=27 // pred_fallthru
        _
      // Predicated region
      $region57: #{lsm_transformer_forward.1} parent=27 // pred_check
        %p537 = pneg %p257
      $region58: #{lsm_transformer_forward.1} parent=27 // pred_check_branch
        %539 = sbr.rel (%p537) target = $region60
      $region59: #{lsm_transformer_forward.1} parent=27 // pred_region
        %p540 = scmp.lt.s32.totalorder %s30, 1
        %s541 = scalar_select %p540, %s30, 1
        %s542 = smul.addr %s541, 4
        %s543 = smul.addr %s542, 4
        %s544 = scalar_lea.vmem %s8, %s543
      $region60: #{lsm_transformer_forward.1} parent=27 // pred_fallthru
        _
      // Predicated region
      $region61: #{lsm_transformer_forward.1} parent=27 // pred_check
        %p545 = pneg %p283
      $region62: #{lsm_transformer_forward.1} parent=27 // pred_check_branch
        %547 = sbr.rel (%p545) target = $region64
      $region63: #{lsm_transformer_forward.1} parent=27 // pred_region
        %p548 = scmp.lt.s32.totalorder %s30, 1
        %s549 = scalar_select %p548, %s30, 1
        %s550 = scalar_lea.vmem %s9, %s549
      $region64: #{lsm_transformer_forward.1} parent=27 // pred_fallthru
        _
      // Predicated region
      $region65: #{lsm_transformer_forward.1} parent=27 // pred_check
        %p551 = pneg %p309
      $region66: #{lsm_transformer_forward.1} parent=27 // pred_check_branch
        %553 = sbr.rel (%p551) target = $region68
      $region67: #{lsm_transformer_forward.1} parent=27 // pred_region
        %p554 = scmp.lt.s32.totalorder %s30, 1
        %s555 = scalar_select %p554, %s30, 1
        %s556 = smul.addr %s555, 8
        %s557 = smul.addr %s556, 4
        %s558 = scalar_lea.vmem %s10, %s557
      $region68: #{lsm_transformer_forward.1} parent=27 // pred_fallthru
        _
      // Predicated region
      $region69: #{lsm_transformer_forward.1} parent=27 // pred_check
        %p559 = pneg %p335
      $region70: #{lsm_transformer_forward.1} parent=27 // pred_check_branch
        %561 = sbr.rel (%p559) target = $region72
      $region71: #{lsm_transformer_forward.1} parent=27 // pred_region
        %p562 = scmp.lt.s32.totalorder %s30, 1
        %s563 = scalar_select %p562, %s30, 1
        %s564 = scalar_lea.vmem %s11, %s563
      $region72: #{lsm_transformer_forward.1} parent=27 // pred_fallthru
        _
      // Predicated region
      $region73: #{lsm_transformer_forward.1} parent=27 // pred_check
        %p565 = pneg %p361
      $region74: #{lsm_transformer_forward.1} parent=27 // pred_check_branch
        %567 = sbr.rel (%p565) target = $region76
      $region75: #{lsm_transformer_forward.1} parent=27 // pred_region
        %p568 = scmp.lt.s32.totalorder %s30, 1
        %s569 = scalar_select %p568, %s30, 1
        %s570 = scalar_lea.vmem %s12, %s569
      $region76: #{lsm_transformer_forward.1} parent=27 // pred_fallthru
        _
      // Predicated region
      $region77: #{lsm_transformer_forward.1} parent=27 // pred_check
        %p571 = pneg %p387
      $region78: #{lsm_transformer_forward.1} parent=27 // pred_check_branch
        %573 = sbr.rel (%p571) target = $region80
      $region79: #{lsm_transformer_forward.1} parent=27 // pred_region
        %p574 = scmp.lt.s32.totalorder %s30, 1
        %s575 = scalar_select %p574, %s30, 1
        %s576 = scalar_lea.vmem %s13, %s575
      $region80: #{lsm_transformer_forward.1} parent=27 // pred_fallthru
        _
    $region28: #{lsm_transformer_forward.1} parent=5 // pred_fallthru
      _
    %p577 = scmp.le.s32.totalorder 1, %s22
    %p578 = scmp.lt.s32.totalorder %s22, 5
    %p579 = pnand %p577, %p578
    %p580 = pneg %p579
    // Predicated region
    $region81: #{lsm_transformer_forward.1} parent=5 // pred_check
      _
    $region82: #{lsm_transformer_forward.1} parent=5 // pred_check_branch
      %582 = sbr.rel (%p579) target = $region84
    $region83: #{lsm_transformer_forward.1} parent=5 // pred_region
      %s583 = ssub.s32 %s22, 1
      %p584 = scmp.lt.s32.totalorder %s31, 1
      %s585 = scalar_select %p584, %s31, 1
      %s586 = smul.addr %s585, 4
      %s587 = smul.addr %s586, 8
      %s588 = scalar_lea.vmem %s0, %s587
      %p589 = pneg %p60
      %p590 = pneg %p57
      %p591 = pneg %p81
      %p592 = pneg %p78
      %p593 = scmp.lt.s32.totalorder %s32, 1
      %s594 = scalar_select %p593, %s32, 1
      %s595 = smul.addr %s594, 4
      %s596 = smul.addr %s595, 4
      %s597 = scalar_lea.vmem %s2, %s596
      %p598 = pneg %p107
      %p599 = pneg %p104
      %p600 = scmp.lt.s32.totalorder %s32, 1
      %s601 = scalar_select %p600, %s32, 1
      %s602 = scalar_lea.vmem %s3, %s601
      %p603 = pneg %p133
      %p604 = pneg %p130
      %p605 = scmp.lt.s32.totalorder %s32, 1
      %s606 = scalar_select %p605, %s32, 1
      %s607 = smul.addr %s606, 4
      %s608 = smul.addr %s607, 4
      %s609 = scalar_lea.vmem %s4, %s608
      %p610 = pneg %p159
      %p611 = pneg %p156
      %p612 = scmp.lt.s32.totalorder %s32, 1
      %s613 = scalar_select %p612, %s32, 1
      %s614 = scalar_lea.vmem %s5, %s613
      %p615 = pneg %p185
      %p616 = pneg %p182
      %p617 = scmp.lt.s32.totalorder %s32, 1
      %s618 = scalar_select %p617, %s32, 1
      %s619 = scalar_lea.vmem %s6, %s618
      %p620 = pneg %p211
      %p621 = pneg %p208
      %p622 = scmp.lt.s32.totalorder %s32, 1
      %s623 = scalar_select %p622, %s32, 1
      %s624 = scalar_lea.vmem %s7, %s623
      %p625 = pneg %p237
      %p626 = pneg %p234
      %p627 = scmp.lt.s32.totalorder %s32, 1
      %s628 = scalar_select %p627, %s32, 1
      %s629 = smul.addr %s628, 4
      %s630 = smul.addr %s629, 4
      %s631 = scalar_lea.vmem %s8, %s630
      %p632 = pneg %p263
      %p633 = pneg %p260
      %p634 = scmp.lt.s32.totalorder %s32, 1
      %s635 = scalar_select %p634, %s32, 1
      %s636 = scalar_lea.vmem %s9, %s635
      %p637 = pneg %p289
      %p638 = pneg %p286
      %p639 = scmp.lt.s32.totalorder %s32, 1
      %s640 = scalar_select %p639, %s32, 1
      %s641 = smul.addr %s640, 8
      %s642 = smul.addr %s641, 4
      %s643 = scalar_lea.vmem %s10, %s642
      %p644 = pneg %p315
      %p645 = pneg %p312
      %p646 = scmp.lt.s32.totalorder %s32, 1
      %s647 = scalar_select %p646, %s32, 1
      %s648 = scalar_lea.vmem %s11, %s647
      %p649 = pneg %p341
      %p650 = pneg %p338
      %p651 = scmp.lt.s32.totalorder %s32, 1
      %s652 = scalar_select %p651, %s32, 1
      %s653 = scalar_lea.vmem %s12, %s652
      %p654 = pneg %p367
      %p655 = pneg %p364
      %p656 = scmp.lt.s32.totalorder %s32, 1
      %s657 = scalar_select %p656, %s32, 1
      %s658 = scalar_lea.vmem %s13, %s657
      %p659 = pneg %p393
      %p660 = pneg %p390
      %p661 = pneg %p414
      %p662 = pneg %p411
      %p663 = pneg %p435
      %p664 = pneg %p432
      %p665 = pneg %p461
      %p666 = pneg %p458
      %p667 = scmp.lt.s32.totalorder %s31, 1
      %s668 = scalar_select %p667, %s31, 1
      %s669 = smul.addr %s668, 2
      %s670 = smul.addr %s669, 8
      %s671 = scalar_lea.vmem %s16, %s670
      %p672 = scmp.lt.s32.totalorder %s31, 1
      %s673 = scalar_select %p672, %s31, 1
      %s674 = smul.addr %s673, 4
      %s675 = smul.addr %s674, 8
      %s676 = scalar_lea.vmem %s0, %s675
      %p677 = scmp.lt.s32.totalorder %s32, 1
      %s678 = scalar_select %p677, %s32, 1
      %s679 = smul.addr %s678, 4
      %s680 = smul.addr %s679, 4
      %s681 = scalar_lea.vmem %s2, %s680
      %p682 = scmp.lt.s32.totalorder %s32, 1
      %s683 = scalar_select %p682, %s32, 1
      %s684 = scalar_lea.vmem %s3, %s683
      %p685 = scmp.lt.s32.totalorder %s32, 1
      %s686 = scalar_select %p685, %s32, 1
      %s687 = smul.addr %s686, 4
      %s688 = smul.addr %s687, 4
      %s689 = scalar_lea.vmem %s4, %s688
      %p690 = scmp.lt.s32.totalorder %s32, 1
      %s691 = scalar_select %p690, %s32, 1
      %s692 = scalar_lea.vmem %s5, %s691
      %p693 = scmp.lt.s32.totalorder %s32, 1
      %s694 = scalar_select %p693, %s32, 1
      %s695 = scalar_lea.vmem %s6, %s694
      %p696 = scmp.lt.s32.totalorder %s32, 1
      %s697 = scalar_select %p696, %s32, 1
      %s698 = scalar_lea.vmem %s7, %s697
      %p699 = scmp.lt.s32.totalorder %s32, 1
      %s700 = scalar_select %p699, %s32, 1
      %s701 = smul.addr %s700, 4
      %s702 = smul.addr %s701, 4
      %s703 = scalar_lea.vmem %s8, %s702
      %p704 = scmp.lt.s32.totalorder %s32, 1
      %s705 = scalar_select %p704, %s32, 1
      %s706 = scalar_lea.vmem %s9, %s705
      %p707 = scmp.lt.s32.totalorder %s32, 1
      %s708 = scalar_select %p707, %s32, 1
      %s709 = smul.addr %s708, 8
      %s710 = smul.addr %s709, 4
      %s711 = scalar_lea.vmem %s10, %s710
      %p712 = scmp.lt.s32.totalorder %s32, 1
      %s713 = scalar_select %p712, %s32, 1
      %s714 = scalar_lea.vmem %s11, %s713
      %p715 = scmp.lt.s32.totalorder %s32, 1
      %s716 = scalar_select %p715, %s32, 1
      %s717 = scalar_lea.vmem %s12, %s716
      %p718 = scmp.lt.s32.totalorder %s32, 1
      %s719 = scalar_select %p718, %s32, 1
      %s720 = scalar_lea.vmem %s13, %s719
      %p721 = scmp.lt.s32.totalorder %s31, 1
      %s722 = scalar_select %p721, %s31, 1
      %s723 = smul.addr %s722, 2
      %s724 = smul.addr %s723, 8
      %s725 = scalar_lea.vmem %s16, %s724
      %p727 = scmp.eq.s32.totalorder %s32, 0
      // Predicated region
      $region85: #{lsm_transformer_forward.1} parent=83 // pred_check
        %p728 = pneg %p727
      $region86: #{lsm_transformer_forward.1} parent=83 // pred_check_branch
        %730 = sbr.rel (%p728) target = $region88
      $region87: #{lsm_transformer_forward.1} parent=83 // pred_region
        %v731 = vld [vmem:[%s1] sm:$0xff]
        %v732 = vld [vmem:[%s676] sm:$0xff]
        %v733 = vld [vmem:[%s676 + $0x8] sm:$0xff]
        %v734 = vld [vmem:[%s676 + $0x10] sm:$0xff]
        %v735 = vld [vmem:[%s676 + $0x18] sm:$0xff]
        %736 = vxpose.xlu0.b32.start [1/16] %v732, 128
        %737 = vxpose.xlu0.b32.cont [2/16] %v733, 128
        %738 = vxpose.xlu0.b32.cont [3/16] %v734, 128
        %739 = vxpose.xlu0.b32.cont [4/16] %v735, 128
        %740 = vxpose.xlu0.b32.cont [5/16] 0.0, 128
        %741 = vxpose.xlu0.b32.cont [6/16] 0.0, 128
        %742 = vxpose.xlu0.b32.cont [7/16] 0.0, 128
        %743 = vxpose.xlu0.b32.cont [8/16] 0.0, 128
        %744 = vxpose.xlu0.b32.cont [9/16] 0.0, 128
        %745 = vxpose.xlu0.b32.cont [10/16] 0.0, 128
        %746 = vxpose.xlu0.b32.cont [11/16] 0.0, 128
        %747 = vxpose.xlu0.b32.cont [12/16] 0.0, 128
        %748 = vxpose.xlu0.b32.cont [13/16] 0.0, 128
        %749 = vxpose.xlu0.b32.cont [14/16] 0.0, 128
        %750 = vxpose.xlu0.b32.cont [15/16] 0.0, 128
        %751 = vxpose.xlu0.b32.end [16/16] 0.0, 128
        %v752 = vpop.trf.xlu0
        %v753 = vpop.trf.xlu0
        %v754 = vpop.trf.xlu0
        %v755 = vpop.trf.xlu0
        %v756 = vpop.trf.xlu0
        %v757 = vpop.trf.xlu0
        %v758 = vpop.trf.xlu0
        %v759 = vpop.trf.xlu0
        %v760 = vpop.trf.xlu0
        %v761 = vpop.trf.xlu0
        %v762 = vpop.trf.xlu0
        %v763 = vpop.trf.xlu0
        %v764 = vpop.trf.xlu0
        %v765 = vpop.trf.xlu0
        %v766 = vpop.trf.xlu0
        %v767 = vpop.trf.xlu0
        %v768 = vadd.f32 %v752, %v731
        %vm769 = vcmask 261120
        %770 = vst.msk [vmem:[#allocation2] sm:$0xff] %vm769, %v768
      $region88: #{lsm_transformer_forward.1} parent=83 // pred_fallthru
        _
      %v771 = vld [vmem:[#allocation2] sm:$0xff]
      %v772 = vlaneseq
      %v773 = vshrl.u32 %v772, 7
      %v774 = vlaneseq
      %v775 = vand.u32 %v774, 127
      %vm776 = vcmp.le.s32.totalorder %v775, %v773
      %v777 = vsel %vm776, 0.0, -1e+30
      %v778 = vpack.c.bf16 %v771, %v771
      %v779 = vld [vmem:[%s681] sm:$0xf]
      %v780 = vld [vmem:[%s681 + $0x4] sm:$0xf]
      %v781 = vld [vmem:[%s681 + $0x8] sm:$0xf]
      %v782 = vld [vmem:[%s681 + $0xc] sm:$0xf]
      %v783 = vld [vmem:[%s684] sm:$0x1]
      %v785 = vperm.slane %v783, 0
      %v791 = vunpack.c.l.b16 %v779
      %v792 = vunpack.c.l.b16 %v780
      %v793 = vunpack.c.l.b16 %v781
      %v794 = vunpack.c.l.b16 %v782
      %v795 = vpack.c.b16 %v792, %v791
      %v796 = vpack.c.b16 %v794, %v793
      %vm799 = vcmask 261120
      %v801 = vsel %vm799, %v778, 0
      %803 = vmatpush.bf16.msra.mxu0 0
      %804 = vmatpush.bf16.msra.mxu0 0
      %805 = vmatpush.bf16.msra.mxu0 0
      %806 = vmatpush.bf16.msra.mxu0 0
      %807 = vmatpush.bf16.msra.mxu0 0
      %808 = vmatpush.bf16.msra.mxu0 0
      %809 = vmatpush.bf16.msra.mxu0 %v796
      %810 = vmatpush.bf16.msra.mxu0 %v795
      %811 = vmatmul.bf16.gmra.mxu0 %v801
      %v812 = vpop.f32.mrf.mxu0
      %v813 = vadd.f32 %v785, %v812
      %v814 = vpop.f32.mrf.mxu0
      %815 = vdwg.mxu0
      %v816 = vpack.c.bf16 %v813, %v813
      %v818 = vunpack.c.l.b16 %v816
      %v819 = vpack.c.b16 %v818, %v818
      %820 = vrot.lane.b32.xlu0 %v819, 96
      %v821 = vpop.permute.xlu0 %820
      %vm822 = vcmask 64512
      %v824 = vsel %vm822, %v816, 0
      %v827 = vsel %vm822, %v821, 0
      %829 = vmatpush.bf16.xpose.msra.mxu0 0
      %830 = vmatpush.bf16.xpose.msra.mxu0 0
      %831 = vmatpush.bf16.xpose.msra.mxu0 0
      %832 = vmatpush.bf16.xpose.msra.mxu0 0
      %833 = vmatpush.bf16.xpose.msra.mxu0 0
      %834 = vmatpush.bf16.xpose.msra.mxu0 0
      %835 = vmatpush.bf16.xpose.msra.mxu0 0
      %836 = vmatpush.bf16.xpose.msra.mxu0 %v827
      %837 = vmatmul.bf16.gmra.mxu0 %v824
      %v838 = vpop.f32.mrf.mxu0
      %v839 = vadd.f32 %v777, %v838
      %v840 = vpop.f32.mrf.mxu0
      %841 = vdwg.mxu0
      %v842 = vsel %vm822, %v839, -inf
      %843 = vmax.xlane.f32.xlu0 %v842
      %v844 = vpop.xlane.xlu0 %843
      %v845 = vsub.f32 %v839, %v844
      %v846 = vmul.f32 %v845, 1.442695
      %v847 = vpow.pop %v846
      %v848 = vsel %vm822, %v847, 0.0
      %849 = vadd.xlane.f32.xlu0 %v848
      %v850 = vpop.xlane.xlu0 %849
      %v851 = vrcp.pop %v850
      %v852 = vmul.f32 %v847, %v851
      %v853 = vpack.c.bf16 %v852, %v852
      %854 = vrot.lane.b32.xlu0 %v819, 64
      %v855 = vpop.permute.xlu0 %854
      %v857 = vsel %vm822, %v853, 0
      %vm859 = vcmask 1043456
      %v861 = vsel %vm859, %v855, 0
      %863 = vmatpush.bf16.msra.mxu0 0
      %864 = vmatpush.bf16.msra.mxu0 0
      %865 = vmatpush.bf16.msra.mxu0 0
      %866 = vmatpush.bf16.msra.mxu0 0
      %867 = vmatpush.bf16.msra.mxu0 0
      %868 = vmatpush.bf16.msra.mxu0 0
      %869 = vmatpush.bf16.msra.mxu0 0
      %870 = vmatpush.bf16.msra.mxu0 %v861
      %871 = vmatmul.bf16.gmra.mxu0 %v857
      %v872 = vpop.f32.mrf.mxu0
      %v873 = vadd.f32 0.0, %v872
      %v874 = vpop.f32.mrf.mxu0
      %875 = vdwg.mxu0
      %876 = vst.msk [vmem:[#allocation3] sm:$0xff] %vm822, %v873
      %877 = vrot.lane.b32.xlu0 %v819, 120
      %v878 = vpop.permute.xlu0 %877
      %879 = vrot.lane.b32.xlu0 %v819, 88
      %v880 = vpop.permute.xlu0 %879
      %v882 = vsel %vm822, %v878, 0
      %v885 = vsel %vm822, %v880, 0
      %887 = vmatpush.bf16.xpose.msra.mxu0 0
      %888 = vmatpush.bf16.xpose.msra.mxu0 0
      %889 = vmatpush.bf16.xpose.msra.mxu0 0
      %890 = vmatpush.bf16.xpose.msra.mxu0 0
      %891 = vmatpush.bf16.xpose.msra.mxu0 0
      %892 = vmatpush.bf16.xpose.msra.mxu0 0
      %893 = vmatpush.bf16.xpose.msra.mxu0 0
      %894 = vmatpush.bf16.xpose.msra.mxu0 %v885
      %895 = vmatmul.bf16.gmra.mxu0 %v882
      %v896 = vpop.f32.mrf.mxu0
      %v897 = vadd.f32 %v777, %v896
      %v898 = vpop.f32.mrf.mxu0
      %899 = vdwg.mxu0
      %v900 = vsel %vm822, %v897, -inf
      %901 = vmax.xlane.f32.xlu0 %v900
      %v902 = vpop.xlane.xlu0 %901
      %v903 = vsub.f32 %v897, %v902
      %v904 = vmul.f32 %v903, 1.442695
      %v905 = vpow.pop %v904
      %v906 = vsel %vm822, %v905, 0.0
      %907 = vadd.xlane.f32.xlu0 %v906
      %v908 = vpop.xlane.xlu0 %907
      %v909 = vrcp.pop %v908
      %v910 = vmul.f32 %v905, %v909
      %v911 = vpack.c.bf16 %v910, %v910
      %912 = vrot.lane.b32.xlu0 %v819, 56
      %v913 = vpop.permute.xlu0 %912
      %v915 = vsel %vm822, %v911, 0
      %v918 = vsel %vm859, %v913, 0
      %920 = vmatpush.bf16.msra.mxu0 0
      %921 = vmatpush.bf16.msra.mxu0 0
      %922 = vmatpush.bf16.msra.mxu0 0
      %923 = vmatpush.bf16.msra.mxu0 0
      %924 = vmatpush.bf16.msra.mxu0 0
      %925 = vmatpush.bf16.msra.mxu0 0
      %926 = vmatpush.bf16.msra.mxu0 0
      %927 = vmatpush.bf16.msra.mxu0 %v918
      %928 = vmatmul.bf16.gmra.mxu0 %v915
      %v929 = vpop.f32.mrf.mxu0
      %v930 = vadd.f32 0.0, %v929
      %v931 = vpop.f32.mrf.mxu0
      %932 = vdwg.mxu0
      %934 = vrot.lane.b32.xlu0 %v930, 8
      %v935 = vpop.permute.xlu0 %934
      %vm937 = vcmask 130112
      %938 = vst.msk [vmem:[#allocation3] sm:$0xff] %vm937, %v935
      %939 = vrot.lane.b32.xlu0 %v819, 112
      %v940 = vpop.permute.xlu0 %939
      %941 = vrot.lane.b32.xlu0 %v819, 80
      %v942 = vpop.permute.xlu0 %941
      %v944 = vsel %vm822, %v940, 0
      %v947 = vsel %vm822, %v942, 0
      %949 = vmatpush.bf16.xpose.msra.mxu0 0
      %950 = vmatpush.bf16.xpose.msra.mxu0 0
      %951 = vmatpush.bf16.xpose.msra.mxu0 0
      %952 = vmatpush.bf16.xpose.msra.mxu0 0
      %953 = vmatpush.bf16.xpose.msra.mxu0 0
      %954 = vmatpush.bf16.xpose.msra.mxu0 0
      %955 = vmatpush.bf16.xpose.msra.mxu0 0
      %956 = vmatpush.bf16.xpose.msra.mxu0 %v947
      %957 = vmatmul.bf16.gmra.mxu0 %v944
      %v958 = vpop.f32.mrf.mxu0
      %v959 = vadd.f32 %v777, %v958
      %v960 = vpop.f32.mrf.mxu0
      %961 = vdwg.mxu0
      %v962 = vsel %vm822, %v959, -inf
      %963 = vmax.xlane.f32.xlu0 %v962
      %v964 = vpop.xlane.xlu0 %963
      %v965 = vsub.f32 %v959, %v964
      %v966 = vmul.f32 %v965, 1.442695
      %v967 = vpow.pop %v966
      %v968 = vsel %vm822, %v967, 0.0
      %969 = vadd.xlane.f32.xlu0 %v968
      %v970 = vpop.xlane.xlu0 %969
      %v971 = vrcp.pop %v970
      %v972 = vmul.f32 %v967, %v971
      %v973 = vpack.c.bf16 %v972, %v972
      %974 = vrot.lane.b32.xlu0 %v819, 48
      %v975 = vpop.permute.xlu0 %974
      %v977 = vsel %vm822, %v973, 0
      %v980 = vsel %vm859, %v975, 0
      %982 = vmatpush.bf16.msra.mxu0 0
      %983 = vmatpush.bf16.msra.mxu0 0
      %984 = vmatpush.bf16.msra.mxu0 0
      %985 = vmatpush.bf16.msra.mxu0 0
      %986 = vmatpush.bf16.msra.mxu0 0
      %987 = vmatpush.bf16.msra.mxu0 0
      %988 = vmatpush.bf16.msra.mxu0 0
      %989 = vmatpush.bf16.msra.mxu0 %v980
      %990 = vmatmul.bf16.gmra.mxu0 %v977
      %v991 = vpop.f32.mrf.mxu0
      %v992 = vadd.f32 0.0, %v991
      %v993 = vpop.f32.mrf.mxu0
      %994 = vdwg.mxu0
      %996 = vrot.lane.b32.xlu0 %v992, 16
      %v997 = vpop.permute.xlu0 %996
      %vm999 = vcmask 195712
      %1000 = vst.msk [vmem:[#allocation3] sm:$0xff] %vm999, %v997
      %1001 = vrot.lane.b32.xlu0 %v819, 104
      %v1002 = vpop.permute.xlu0 %1001
      %1003 = vrot.lane.b32.xlu0 %v819, 72
      %v1004 = vpop.permute.xlu0 %1003
      %v1006 = vsel %vm822, %v1002, 0
      %v1009 = vsel %vm822, %v1004, 0
      %1011 = vmatpush.bf16.xpose.msra.mxu0 0
      %1012 = vmatpush.bf16.xpose.msra.mxu0 0
      %1013 = vmatpush.bf16.xpose.msra.mxu0 0
      %1014 = vmatpush.bf16.xpose.msra.mxu0 0
      %1015 = vmatpush.bf16.xpose.msra.mxu0 0
      %1016 = vmatpush.bf16.xpose.msra.mxu0 0
      %1017 = vmatpush.bf16.xpose.msra.mxu0 0
      %1018 = vmatpush.bf16.xpose.msra.mxu0 %v1009
      %1019 = vmatmul.bf16.gmra.mxu0 %v1006
      %v1020 = vpop.f32.mrf.mxu0
      %v1021 = vadd.f32 %v777, %v1020
      %v1022 = vpop.f32.mrf.mxu0
      %1023 = vdwg.mxu0
      %v1024 = vsel %vm822, %v1021, -inf
      %1025 = vmax.xlane.f32.xlu0 %v1024
      %v1026 = vpop.xlane.xlu0 %1025
      %v1027 = vsub.f32 %v1021, %v1026
      %v1028 = vmul.f32 %v1027, 1.442695
      %v1029 = vpow.pop %v1028
      %v1030 = vsel %vm822, %v1029, 0.0
      %1031 = vadd.xlane.f32.xlu0 %v1030
      %v1032 = vpop.xlane.xlu0 %1031
      %v1033 = vrcp.pop %v1032
      %v1034 = vmul.f32 %v1029, %v1033
      %v1035 = vpack.c.bf16 %v1034, %v1034
      %1036 = vrot.lane.b32.xlu0 %v819, 40
      %v1037 = vpop.permute.xlu0 %1036
      %v1039 = vsel %vm822, %v1035, 0
      %v1042 = vsel %vm859, %v1037, 0
      %1044 = vmatpush.bf16.msra.mxu0 0
      %1045 = vmatpush.bf16.msra.mxu0 0
      %1046 = vmatpush.bf16.msra.mxu0 0
      %1047 = vmatpush.bf16.msra.mxu0 0
      %1048 = vmatpush.bf16.msra.mxu0 0
      %1049 = vmatpush.bf16.msra.mxu0 0
      %1050 = vmatpush.bf16.msra.mxu0 0
      %1051 = vmatpush.bf16.msra.mxu0 %v1042
      %1052 = vmatmul.bf16.gmra.mxu0 %v1039
      %v1053 = vpop.f32.mrf.mxu0
      %v1054 = vadd.f32 0.0, %v1053
      %v1055 = vpop.f32.mrf.mxu0
      %1056 = vdwg.mxu0
      %1058 = vrot.lane.b32.xlu0 %v1054, 24
      %v1059 = vpop.permute.xlu0 %1058
      %vm1061 = vcmask 261312
      %1062 = vst.msk [vmem:[#allocation3] sm:$0xff] %vm1061, %v1059
      %v1063 = vld [vmem:[#allocation3] sm:$0xff]
      %v1064 = vpack.c.bf16 %v1063, %v1063
      %v1065 = vld [vmem:[%s689] sm:$0xf]
      %v1066 = vld [vmem:[%s689 + $0x4] sm:$0xf]
      %v1067 = vld [vmem:[%s689 + $0x8] sm:$0xf]
      %v1068 = vld [vmem:[%s689 + $0xc] sm:$0xf]
      %v1069 = vld [vmem:[%s692] sm:$0x1]
      %v1071 = vperm.slane %v1069, 0
      %v1077 = vunpack.c.l.b16 %v1065
      %v1078 = vunpack.c.l.b16 %v1066
      %v1079 = vunpack.c.l.b16 %v1067
      %v1080 = vunpack.c.l.b16 %v1068
      %v1081 = vpack.c.b16 %v1078, %v1077
      %v1082 = vpack.c.b16 %v1080, %v1079
      %v1086 = vsel %vm799, %v1064, 0
      %1088 = vmatpush.bf16.msra.mxu0 0
      %1089 = vmatpush.bf16.msra.mxu0 0
      %1090 = vmatpush.bf16.msra.mxu0 0
      %1091 = vmatpush.bf16.msra.mxu0 0
      %1092 = vmatpush.bf16.msra.mxu0 0
      %1093 = vmatpush.bf16.msra.mxu0 0
      %1094 = vmatpush.bf16.msra.mxu0 %v1082
      %1095 = vmatpush.bf16.msra.mxu0 %v1081
      %1096 = vmatmul.bf16.gmra.mxu0 %v1086
      %v1097 = vpop.f32.mrf.mxu0
      %v1098 = vadd.f32 %v1071, %v1097
      %v1099 = vpop.f32.mrf.mxu0
      %1100 = vdwg.mxu0
      %v1101 = vadd.f32 %v771, %v1098
      %v1102 = vsel %vm799, %v1101, 0.0
      %1103 = vadd.xlane.f32.xlu0 %v1102
      %v1104 = vpop.xlane.xlu0 %1103
      %v1105 = vrcp.pop 32.0
      %v1106 = vmul.f32 32.0, %v1105
      %v1107 = vsub.f32 1.0, %v1106
      %v1108 = vmul.f32 %v1105, %v1107
      %v1109 = vadd.f32 %v1105, %v1108
      %vm1110 = vweird.f32 %v1105
      %v1111 = vsel %vm1110, %v1105, %v1109
      %v1112 = vmul.f32 %v1104, %v1111
      %v1113 = vsub.f32 %v1101, %v1112
      %v1114 = vmul.f32 %v1113, %v1113
      %v1115 = vsel %vm799, %v1114, 0.0
      %1116 = vadd.xlane.f32.xlu0 %v1115
      %v1117 = vpop.xlane.xlu0 %1116
      %v1118 = vmul.f32 %v1117, %v1111
      %v1119 = vadd.f32 %v1118, 1e-05
      %v1120 = vrsqrt.pop %v1119
      %v1121 = vmul.f32 %v1120, %v1119
      %v1122 = vmul.f32 %v1121, %v1120
      %v1123 = vmul.f32 0.5, %v1122
      %v1124 = vsub.f32 1.5, %v1123
      %v1125 = vmul.f32 %v1120, %v1124
      %vm1126 = vweird.f32 %v1119
      %vm1127 = vweird.f32 %v1120
      %vm1128 = vmor %vm1126, %vm1127
      %v1129 = vsel %vm1128, %v1120, %v1125
      %v1130 = vmul.f32 %v1113, %v1129
      %v1131 = vld [vmem:[%s695] sm:$0x1]
      %v1133 = vperm.slane %v1131, 0
      %v1135 = vmul.f32 %v1130, %v1133
      %v1136 = vld [vmem:[%s698] sm:$0x1]
      %v1138 = vperm.slane %v1136, 0
      %v1140 = vadd.f32 %v1135, %v1138
      %v1141 = vpack.c.bf16 %v1140, %v1140
      %v1142 = vld [vmem:[%s703] sm:$0xf]
      %v1143 = vld [vmem:[%s703 + $0x4] sm:$0xf]
      %v1144 = vld [vmem:[%s703 + $0x8] sm:$0xf]
      %v1145 = vld [vmem:[%s703 + $0xc] sm:$0xf]
      %v1146 = vld [vmem:[%s706] sm:$0x1]
      %v1148 = vperm.slane %v1146, 0
      %v1154 = vunpack.c.l.b16 %v1142
      %v1155 = vunpack.c.l.b16 %v1143
      %v1156 = vunpack.c.l.b16 %v1144
      %v1157 = vunpack.c.l.b16 %v1145
      %v1158 = vpack.c.b16 %v1155, %v1154
      %v1159 = vpack.c.b16 %v1157, %v1156
      %v1163 = vsel %vm799, %v1141, 0
      %1165 = vmatpush.bf16.msra.mxu0 0
      %1166 = vmatpush.bf16.msra.mxu0 0
      %1167 = vmatpush.bf16.msra.mxu0 0
      %1168 = vmatpush.bf16.msra.mxu0 0
      %1169 = vmatpush.bf16.msra.mxu0 0
      %1170 = vmatpush.bf16.msra.mxu0 0
      %1171 = vmatpush.bf16.msra.mxu0 %v1159
      %1172 = vmatpush.bf16.msra.mxu0 %v1158
      %1173 = vmatmul.bf16.gmra.mxu0 %v1163
      %v1174 = vpop.f32.mrf.mxu0
      %v1175 = vadd.f32 %v1148, %v1174
      %v1176 = vpop.f32.mrf.mxu0
      %1177 = vdwg.mxu0
      %v1178 = vmax.f32 %v1175, 0.0
      %v1179 = vpack.c.bf16 %v1178, %v1178
      %v1180 = vld [vmem:[%s711] sm:$0xf]
      %v1181 = vld [vmem:[%s711 + $0x4] sm:$0xf]
      %v1182 = vld [vmem:[%s711 + $0x8] sm:$0xf]
      %v1183 = vld [vmem:[%s711 + $0xc] sm:$0xf]
      %v1184 = vld [vmem:[%s711 + $0x10] sm:$0xf]
      %v1185 = vld [vmem:[%s711 + $0x14] sm:$0xf]
      %v1186 = vld [vmem:[%s711 + $0x18] sm:$0xf]
      %v1187 = vld [vmem:[%s711 + $0x1c] sm:$0xf]
      %v1188 = vld [vmem:[%s714] sm:$0x1]
      %v1190 = vperm.slane %v1188, 0
      %v1200 = vunpack.c.l.b16 %v1180
      %v1201 = vunpack.c.l.b16 %v1181
      %v1202 = vunpack.c.l.b16 %v1182
      %v1203 = vunpack.c.l.b16 %v1183
      %v1204 = vunpack.c.l.b16 %v1184
      %v1205 = vunpack.c.l.b16 %v1185
      %v1206 = vunpack.c.l.b16 %v1186
      %v1207 = vunpack.c.l.b16 %v1187
      %v1208 = vpack.c.b16 %v1201, %v1200
      %v1209 = vpack.c.b16 %v1203, %v1202
      %v1210 = vpack.c.b16 %v1205, %v1204
      %v1211 = vpack.c.b16 %v1207, %v1206
      %vm1216 = vcmask 523264
      %v1218 = vsel %vm1216, %v1179, 0
      %1220 = vmatpush.bf16.msra.mxu0 0
      %1221 = vmatpush.bf16.msra.mxu0 0
      %1222 = vmatpush.bf16.msra.mxu0 0
      %1223 = vmatpush.bf16.msra.mxu0 0
      %1224 = vmatpush.bf16.msra.mxu0 %v1211
      %1225 = vmatpush.bf16.msra.mxu0 %v1210
      %1226 = vmatpush.bf16.msra.mxu0 %v1209
      %1227 = vmatpush.bf16.msra.mxu0 %v1208
      %1228 = vmatmul.bf16.gmra.mxu0 %v1218
      %v1229 = vpop.f32.mrf.mxu0
      %v1230 = vadd.f32 %v1190, %v1229
      %v1231 = vpop.f32.mrf.mxu0
      %1232 = vdwg.mxu0
      %v1233 = vadd.f32 %v1140, %v1230
      %v1234 = vsel %vm799, %v1233, 0.0
      %1235 = vadd.xlane.f32.xlu0 %v1234
      %v1236 = vpop.xlane.xlu0 %1235
      %v1237 = vmul.f32 %v1236, %v1111
      %v1238 = vsub.f32 %v1233, %v1237
      %v1239 = vmul.f32 %v1238, %v1238
      %v1240 = vsel %vm799, %v1239, 0.0
      %1241 = vadd.xlane.f32.xlu0 %v1240
      %v1242 = vpop.xlane.xlu0 %1241
      %v1243 = vmul.f32 %v1242, %v1111
      %v1244 = vadd.f32 %v1243, 1e-05
      %v1245 = vrsqrt.pop %v1244
      %v1246 = vmul.f32 %v1245, %v1244
      %v1247 = vmul.f32 %v1246, %v1245
      %v1248 = vmul.f32 0.5, %v1247
      %v1249 = vsub.f32 1.5, %v1248
      %v1250 = vmul.f32 %v1245, %v1249
      %vm1251 = vweird.f32 %v1244
      %vm1252 = vweird.f32 %v1245
      %vm1253 = vmor %vm1251, %vm1252
      %v1254 = vsel %vm1253, %v1245, %v1250
      %v1255 = vmul.f32 %v1238, %v1254
      %v1256 = vld [vmem:[%s717] sm:$0x1]
      %v1258 = vperm.slane %v1256, 0
      %v1260 = vmul.f32 %v1255, %v1258
      %v1261 = vld [vmem:[%s720] sm:$0x1]
      %v1263 = vperm.slane %v1261, 0
      %v1265 = vadd.f32 %v1260, %v1263
      %1266 = vst.msk [vmem:[#allocation2] sm:$0xff] %vm799, %v1265
      %p1267 = scmp.eq.s32.totalorder %s32, 1
      // Predicated region
      $region89: #{lsm_transformer_forward.1} parent=83 // pred_check
        %p1268 = pneg %p1267
      $region90: #{lsm_transformer_forward.1} parent=83 // pred_check_branch
        %1270 = sbr.rel (%p1268) target = $region92
      $region91: #{lsm_transformer_forward.1} parent=83 // pred_region
        %v1271 = vpack.c.bf16 %v1265, %v1265
        %v1272 = vld [vmem:[%s14] sm:$0xf]
        %v1273 = vld [vmem:[%s14 + $0x4] sm:$0xf]
        %v1274 = vld [vmem:[%s14 + $0x8] sm:$0xf]
        %v1275 = vld [vmem:[%s14 + $0xc] sm:$0xf]
        %v1276 = vld [vmem:[%s15] sm:$0x1]
        %v1278 = vperm.slane %v1276, 0
        %v1284 = vunpack.c.l.b16 %v1272
        %v1285 = vunpack.c.l.b16 %v1273
        %v1286 = vunpack.c.l.b16 %v1274
        %v1287 = vunpack.c.l.b16 %v1275
        %v1288 = vpack.c.b16 %v1285, %v1284
        %v1289 = vpack.c.b16 %v1287, %v1286
        %v1293 = vsel %vm799, %v1271, 0
        %1295 = vmatpush.bf16.msra.mxu0 0
        %1296 = vmatpush.bf16.msra.mxu0 0
        %1297 = vmatpush.bf16.msra.mxu0 0
        %1298 = vmatpush.bf16.msra.mxu0 0
        %1299 = vmatpush.bf16.msra.mxu0 0
        %1300 = vmatpush.bf16.msra.mxu0 0
        %1301 = vmatpush.bf16.msra.mxu0 %v1289
        %1302 = vmatpush.bf16.msra.mxu0 %v1288
        %1303 = vmatmul.bf16.gmra.mxu0 %v1293
        %v1304 = vpop.f32.mrf.mxu0
        %v1305 = vadd.f32 %v1278, %v1304
        %v1306 = vpop.f32.mrf.mxu0
        %1307 = vdwg.mxu0
        %1308 = vxpose.xlu0.b32.start [1/16] %v1305, 128
        %1309 = vxpose.xlu0.b32.cont [2/16] 0.0, 128
        %1310 = vxpose.xlu0.b32.cont [3/16] 0.0, 128
        %1311 = vxpose.xlu0.b32.cont [4/16] 0.0, 128
        %1312 = vxpose.xlu0.b32.cont [5/16] 0.0, 128
        %1313 = vxpose.xlu0.b32.cont [6/16] 0.0, 128
        %1314 = vxpose.xlu0.b32.cont [7/16] 0.0, 128
        %1315 = vxpose.xlu0.b32.cont [8/16] 0.0, 128
        %1316 = vxpose.xlu0.b32.cont [9/16] 0.0, 128
        %1317 = vxpose.xlu0.b32.cont [10/16] 0.0, 128
        %1318 = vxpose.xlu0.b32.cont [11/16] 0.0, 128
        %1319 = vxpose.xlu0.b32.cont [12/16] 0.0, 128
        %1320 = vxpose.xlu0.b32.cont [13/16] 0.0, 128
        %1321 = vxpose.xlu0.b32.cont [14/16] 0.0, 128
        %1322 = vxpose.xlu0.b32.cont [15/16] 0.0, 128
        %1323 = vxpose.xlu0.b32.end [16/16] 0.0, 128
        %v1324 = vpop.trf.xlu0
        %v1325 = vpop.trf.xlu0
        %v1326 = vpop.trf.xlu0
        %v1327 = vpop.trf.xlu0
        %v1328 = vpop.trf.xlu0
        %v1329 = vpop.trf.xlu0
        %v1330 = vpop.trf.xlu0
        %v1331 = vpop.trf.xlu0
        %v1332 = vpop.trf.xlu0
        %v1333 = vpop.trf.xlu0
        %v1334 = vpop.trf.xlu0
        %v1335 = vpop.trf.xlu0
        %v1336 = vpop.trf.xlu0
        %v1337 = vpop.trf.xlu0
        %v1338 = vpop.trf.xlu0
        %v1339 = vpop.trf.xlu0
        %1340 = vst.msk [vmem:[%s725] sm:$0xff] %vm822, %v1324
        %1341 = vst.msk [vmem:[%s725 + $0x8] sm:$0xff] %vm822, %v1325
      $region92: #{lsm_transformer_forward.1} parent=83 // pred_fallthru
        _
      %p1342 = scmp.lt.s32.totalorder %s31, 1
      %s1343 = scalar_select %p1342, %s31, 1
      %s1344 = smul.addr %s1343, 2
      %s1345 = smul.addr %s1344, 8
      %s1346 = scalar_lea.vmem %s16, %s1345
      // Predicated region
      $region93: #{lsm_transformer_forward.1} parent=83 // pred_check
        %p1347 = pneg %p458
      $region94: #{lsm_transformer_forward.1} parent=83 // pred_check_branch
        %1349 = sbr.rel (%p1347) target = $region96
      $region95: #{lsm_transformer_forward.1} parent=83 // pred_region
        _
      $region96: #{lsm_transformer_forward.1} parent=83 // pred_fallthru
        _
    $region84: #{lsm_transformer_forward.1} parent=5 // pred_fallthru
      _
    %p1350 = scmp.le.s32.totalorder 2, %s22
    // Predicated region
    $region97: #{lsm_transformer_forward.1} parent=5 // pred_check
      %p1351 = pneg %p1350
    $region98: #{lsm_transformer_forward.1} parent=5 // pred_check_branch
      %1353 = sbr.rel (%p1351) target = $region100
    $region99: #{lsm_transformer_forward.1} parent=5 // pred_region
      %s1354 = ssub.s32 %s22, 2
      // Predicated region
      $region101: #{lsm_transformer_forward.1} parent=99 // pred_check
        %p1355 = pneg %p464
      $region102: #{lsm_transformer_forward.1} parent=99 // pred_check_branch
        %1357 = sbr.rel (%p1355) target = $region104
      $region103: #{lsm_transformer_forward.1} parent=99 // pred_region
        %p1358 = scmp.lt.s32.totalorder %s33, 1
        %s1359 = scalar_select %p1358, %s33, 1
        %s1360 = smul.addr %s1359, 2
        %s1361 = smul.addr %s1360, 8
        %s1362 = scalar_lea.vmem %s16, %s1361
      $region104: #{lsm_transformer_forward.1} parent=99 // pred_fallthru
        _
    $region100: #{lsm_transformer_forward.1} parent=5 // pred_fallthru
      _
  $region6: #{lsm_transformer_forward.1} parent=0 // loop_footer
    %s26 = sadd.s32 1, %s22
  $region7: #{lsm_transformer_forward.1} parent=0 // loop_footer_branch
    %21 = sbr.rel target = $region3
  $region8: #{lsm_transformer_forward.1} parent=0 // loop_exit
    _

</llo_original>
